<compile_context>
chip_gen: v7x
topology: tpu7x:2x2x1
jax: 0.10.0
libtpu: 0.0.40
codegen_flags: <defaults>
</compile_context>

<pallas_src>
import jax
import jax.numpy as jnp
from jax import lax
from jax.experimental import pallas as pl
from jax.experimental.pallas import tpu as pltpu

# ---------------- model dims (small, consistent with the module) -------------
VOCAB = 100
EMBED = 32       # embedding_dim
HIDDEN = 32      # hidden_size
NLAYERS = 2      # n_layers
NCLASSES = 3     # n_classes
DROPOUT_P = 0.2  # dropout (inference mode -> identity)
BATCH = 2
SEQ = 8
LN_EPS = 1e-5


def sentiment_kernel(tok_ref, emb_ref,
                     wih0_ref, whh0_ref, b0_ref,
                     w1_ref, b1_ref,
                     gamma_ref, beta_ref,
                     w_fc1_ref, b_fc1_ref,
                     w_fc2_ref, b_fc2_ref,
                     out_ref):
    """Fused embedding + stacked tanh-RNN + LayerNorm + FC head, all in VMEM."""
    B = out_ref.shape[0]
    TB = tok_ref.shape[0]            # T * B (time-major flattened tokens)
    T = TB // B
    H = whh0_ref.shape[0]
    V = emb_ref.shape[0]

    # ---- fused embedding lookup: one-hot (T*B, V) @ emb (V, E) on the MXU ----
    tok = tok_ref[...]                                            # (T*B, 1) int32
    vocab_iota = lax.broadcasted_iota(jnp.int32, (TB, V), 1)
    onehot = (vocab_iota == tok).astype(jnp.float32)              # (T*B, V)
    x_flat = jnp.dot(onehot, emb_ref[...],
                     preferred_element_type=jnp.float32)          # (T*B, E)

    # ---- layer-0 input projection hoisted out of the recurrence -------------
    # b0 = b_ih0 + b_hh0 folded in once; xproj is time-major: row t*B + b.
    xproj = (jnp.dot(x_flat, wih0_ref[...],
                     preferred_element_type=jnp.float32) + b0_ref[...])  # (T*B, H)

    whh0 = whh0_ref[...]                                  # (H, H)
    w1 = w1_ref[...]                                      # (2H, H) = [wih1; whh1]
    b1 = jnp.broadcast_to(b1_ref[...], (B, H))            # hoisted broadcast

    h0 = jnp.zeros((B, H), jnp.float32)
    h1 = jnp.zeros((B, H), jnp.float32)

    # ---- unrolled 2-layer tanh recurrence: 2 MXU matmuls per time step ------
    for t in range(T):                                    # T is static -> unrolled
        xp_t = xproj[t * B:(t + 1) * B, :]                # static sublane slice (B, H)
        h0 = jnp.tanh(xp_t + jnp.dot(h0, whh0,
                                     preferred_element_type=jnp.float32))
        h01 = jnp.concatenate([h0, h1], axis=-1)          # (B, 2H)
        h1 = jnp.tanh(jnp.dot(h01, w1,
                              preferred_element_type=jnp.float32) + b1)

    # ---- LayerNorm over the hidden dim (biased variance, matches PyTorch) ---
    mean = jnp.mean(h1, axis=-1, keepdims=True)
    var = jnp.mean((h1 - mean) ** 2, axis=-1, keepdims=True)
    xn = (h1 - mean) * lax.rsqrt(var + LN_EPS)            # rsqrt stays on the EUP
    xn = xn * gamma_ref[...] + beta_ref[...]

    # Dropout: inference (eval) mode -> identity.
    # TODO(synk): training-mode dropout (random mask scaled by 1/(1-p)) not emitted.

    # ---- FC head -------------------------------------------------------------
    z = jnp.maximum(
        jnp.dot(xn, w_fc1_ref[...], preferred_element_type=jnp.float32)
        + b_fc1_ref[...], 0.0)                                            # ReLU
    logits = (jnp.dot(z, w_fc2_ref[...], preferred_element_type=jnp.float32)
              + b_fc2_ref[...])
    out_ref[...] = logits.astype(out_ref.dtype)


def _full_spec(shape):
    # No grid: every operand is one whole-array VMEM block.
    return pl.BlockSpec(shape, lambda: tuple(0 for _ in shape))


@jax.jit
def sentiment_forward(tokens, emb_table, params):
    """tokens: (B, T) int32; returns logits (B, NCLASSES)."""
    (wih0, whh0, b0, w1, b1, gamma, beta,
     w_fc1, b_fc1, w_fc2, b_fc2) = params
    B, T = tokens.shape
    # Time-major flattened token column: row t*B + b holds tokens[b, t].
    # (64-byte reshape/transpose; keeps all in-kernel slices static & contiguous.)
    tok_tm = tokens.T.reshape(T * B, 1).astype(jnp.int32)
    operands = (tok_tm, emb_table, wih0, whh0, b0, w1, b1,
                gamma, beta, w_fc1, b_fc1, w_fc2, b_fc2)
    return pl.pallas_call(
        sentiment_kernel,
        out_shape=jax.ShapeDtypeStruct((B, NCLASSES), jnp.float32),
        in_specs=[_full_spec(o.shape) for o in operands],
        out_specs=_full_spec((B, NCLASSES)),
    )(*operands)


def init_params(key):
    """Deterministic synthetic parameters (PyTorch-like init scales), already
    in the fused layout the kernel expects (b0=b_ih0+b_hh0, w1=[wih1;whh1])."""
    ks = jax.random.split(key, 13)
    s_rnn = 1.0 / jnp.sqrt(HIDDEN)
    s_fc1 = 1.0 / jnp.sqrt(HIDDEN)
    s_fc2 = 1.0 / jnp.sqrt(16.0)
    emb = jax.random.normal(ks[0], (VOCAB, EMBED), jnp.float32)
    # layer 0
    wih0 = jax.random.uniform(ks[1], (EMBED, HIDDEN), jnp.float32, -s_rnn, s_rnn)
    whh0 = jax.random.uniform(ks[2], (HIDDEN, HIDDEN), jnp.float32, -s_rnn, s_rnn)
    b0 = (jax.random.uniform(ks[3], (1, HIDDEN), jnp.float32, -s_rnn, s_rnn)
          + jax.random.uniform(ks[4], (1, HIDDEN), jnp.float32, -s_rnn, s_rnn))
    # layer 1 (fused weight: [wih1; whh1])
    wih1 = jax.random.uniform(ks[5], (HIDDEN, HIDDEN), jnp.float32, -s_rnn, s_rnn)
    whh1 = jax.random.uniform(ks[6], (HIDDEN, HIDDEN), jnp.float32, -s_rnn, s_rnn)
    w1 = jnp.concatenate([wih1, whh1], axis=0)           # (2H, H)
    b1 = (jax.random.uniform(ks[7], (1, HIDDEN), jnp.float32, -s_rnn, s_rnn)
          + jax.random.uniform(ks[8], (1, HIDDEN), jnp.float32, -s_rnn, s_rnn))
    # LayerNorm
    gamma = jnp.ones((1, HIDDEN), jnp.float32)
    beta = jnp.zeros((1, HIDDEN), jnp.float32)
    # FC head
    w_fc1 = jax.random.uniform(ks[9], (HIDDEN, 16), jnp.float32, -s_fc1, s_fc1)
    b_fc1 = jax.random.uniform(ks[10], (1, 16), jnp.float32, -s_fc1, s_fc1)
    w_fc2 = jax.random.uniform(ks[11], (16, NCLASSES), jnp.float32, -s_fc2, s_fc2)
    b_fc2 = jax.random.uniform(ks[12], (1, NCLASSES), jnp.float32, -s_fc2, s_fc2)
    return emb, (wih0, whh0, b0, w1, b1, gamma, beta,
                 w_fc1, b_fc1, w_fc2, b_fc2)


if __name__ == "__main__":
    key = jax.random.PRNGKey(0)
    k_tok, k_par = jax.random.split(key)
    emb_table, params = init_params(k_par)

    # token ids (B, T)
    tokens = jax.random.randint(k_tok, (BATCH, SEQ), 0, VOCAB, dtype=jnp.int32)

    logits = sentiment_forward(tokens, emb_table, params)
    jax.block_until_ready(logits)
    assert logits.shape == (BATCH, NCLASSES)
    print("KERNEL_OK")
</pallas_src>

<mosaic_0001>
module attributes {stable_mosaic.version = 11 : i64} {
  func.func @sentiment_kernel(%arg0: memref<16x1xi32, #tpu.memory_space<vmem>>, %arg1: memref<100x32xf32, #tpu.memory_space<vmem>>, %arg2: memref<32x32xf32, #tpu.memory_space<vmem>>, %arg3: memref<32x32xf32, #tpu.memory_space<vmem>>, %arg4: memref<1x32xf32, #tpu.memory_space<vmem>>, %arg5: memref<64x32xf32, #tpu.memory_space<vmem>>, %arg6: memref<1x32xf32, #tpu.memory_space<vmem>>, %arg7: memref<1x32xf32, #tpu.memory_space<vmem>>, %arg8: memref<1x32xf32, #tpu.memory_space<vmem>>, %arg9: memref<32x16xf32, #tpu.memory_space<vmem>>, %arg10: memref<1x16xf32, #tpu.memory_space<vmem>>, %arg11: memref<16x3xf32, #tpu.memory_space<vmem>>, %arg12: memref<1x3xf32, #tpu.memory_space<vmem>>, %arg13: memref<2x3xf32, #tpu.memory_space<vmem>>) attributes {dimension_semantics = [], scalar_prefetch = 0 : i64, scratch_operands = 0 : i64, tpu.core_type = #tpu.core_type<tc>} {
    %c0 = arith.constant 0 : index
    %c0_0 = arith.constant 0 : index
    %0 = vector.load %arg0[%c0, %c0_0] : memref<16x1xi32, #tpu.memory_space<vmem>>, vector<16x1xi32>
    %1 = tpu.iota {dimensions = array<i32: 1>} : vector<16x100xi32>
    %2 = vector.broadcast %0 : vector<16x1xi32> to vector<16x100xi32>
    %3 = arith.cmpi eq, %1, %2 : vector<16x100xi32>
    %4 = arith.extui %3 : vector<16x100xi1> to vector<16x100xi32>
    %5 = arith.sitofp %4 : vector<16x100xi32> to vector<16x100xf32>
    %c0_1 = arith.constant 0 : index
    %c0_2 = arith.constant 0 : index
    %6 = vector.load %arg1[%c0_1, %c0_2] : memref<100x32xf32, #tpu.memory_space<vmem>>, vector<100x32xf32>
    %cst = arith.constant dense<0.000000e+00> : vector<16x32xf32>
    %7 = tpu.matmul %5, %6, %cst {dimension_numbers = #tpu.dot_dimension_numbers<[1], [0], [0], [1], [0, 0, 1, 1], [], []>} : vector<16x100xf32>, vector<100x32xf32>, vector<16x32xf32> -> vector<16x32xf32>
    %c0_3 = arith.constant 0 : index
    %c0_4 = arith.constant 0 : index
    %8 = vector.load %arg2[%c0_3, %c0_4] : memref<32x32xf32, #tpu.memory_space<vmem>>, vector<32x32xf32>
    %cst_5 = arith.constant dense<0.000000e+00> : vector<16x32xf32>
    %9 = tpu.matmul %7, %8, %cst_5 {dimension_numbers = #tpu.dot_dimension_numbers<[1], [0], [0], [1], [0, 0, 1, 1], [], []>} : vector<16x32xf32>, vector<32x32xf32>, vector<16x32xf32> -> vector<16x32xf32>
    %c0_6 = arith.constant 0 : index
    %c0_7 = arith.constant 0 : index
    %10 = vector.load %arg4[%c0_6, %c0_7] : memref<1x32xf32, #tpu.memory_space<vmem>>, vector<1x32xf32>
    %11 = vector.broadcast %10 : vector<1x32xf32> to vector<16x32xf32>
    %12 = arith.addf %9, %11 : vector<16x32xf32>
    %c0_8 = arith.constant 0 : index
    %c0_9 = arith.constant 0 : index
    %13 = vector.load %arg3[%c0_8, %c0_9] : memref<32x32xf32, #tpu.memory_space<vmem>>, vector<32x32xf32>
    %c0_10 = arith.constant 0 : index
    %c0_11 = arith.constant 0 : index
    %14 = vector.load %arg5[%c0_10, %c0_11] : memref<64x32xf32, #tpu.memory_space<vmem>>, vector<64x32xf32>
    %c0_12 = arith.constant 0 : index
    %c0_13 = arith.constant 0 : index
    %15 = vector.load %arg6[%c0_12, %c0_13] : memref<1x32xf32, #tpu.memory_space<vmem>>, vector<1x32xf32>
    %16 = vector.shape_cast %15 : vector<1x32xf32> to vector<1x32xf32>
    %17 = vector.broadcast %16 : vector<1x32xf32> to vector<2x32xf32>
    %cst_14 = arith.constant 0.000000e+00 : f32
    %18 = vector.broadcast %cst_14 : f32 to vector<2x32xf32>
    %cst_15 = arith.constant 0.000000e+00 : f32
    %19 = vector.broadcast %cst_15 : f32 to vector<2x32xf32>
    %20 = vector.extract_strided_slice %12 {offsets = [0, 0], sizes = [2, 32], strides = [1, 1]} : vector<16x32xf32> to vector<2x32xf32>
    %cst_16 = arith.constant dense<0.000000e+00> : vector<2x32xf32>
    %21 = tpu.matmul %18, %13, %cst_16 {dimension_numbers = #tpu.dot_dimension_numbers<[1], [0], [0], [1], [0, 0, 1, 1], [], []>} : vector<2x32xf32>, vector<32x32xf32>, vector<2x32xf32> -> vector<2x32xf32>
    %22 = arith.addf %20, %21 : vector<2x32xf32>
    %23 = math.tanh %22 : vector<2x32xf32>
    %24 = tpu.concatenate %23, %19 in 1 : vector<2x32xf32>, vector<2x32xf32> -> vector<2x64xf32>
    %cst_17 = arith.constant dense<0.000000e+00> : vector<2x32xf32>
    %25 = tpu.matmul %24, %14, %cst_17 {dimension_numbers = #tpu.dot_dimension_numbers<[1], [0], [0], [1], [0, 0, 1, 1], [], []>} : vector<2x64xf32>, vector<64x32xf32>, vector<2x32xf32> -> vector<2x32xf32>
    %26 = arith.addf %25, %17 : vector<2x32xf32>
    %27 = math.tanh %26 : vector<2x32xf32>
    %28 = vector.extract_strided_slice %12 {offsets = [2, 0], sizes = [2, 32], strides = [1, 1]} : vector<16x32xf32> to vector<2x32xf32>
    %cst_18 = arith.constant dense<0.000000e+00> : vector<2x32xf32>
    %29 = tpu.matmul %23, %13, %cst_18 {dimension_numbers = #tpu.dot_dimension_numbers<[1], [0], [0], [1], [0, 0, 1, 1], [], []>} : vector<2x32xf32>, vector<32x32xf32>, vector<2x32xf32> -> vector<2x32xf32>
    %30 = arith.addf %28, %29 : vector<2x32xf32>
    %31 = math.tanh %30 : vector<2x32xf32>
    %32 = tpu.concatenate %31, %27 in 1 : vector<2x32xf32>, vector<2x32xf32> -> vector<2x64xf32>
    %cst_19 = arith.constant dense<0.000000e+00> : vector<2x32xf32>
    %33 = tpu.matmul %32, %14, %cst_19 {dimension_numbers = #tpu.dot_dimension_numbers<[1], [0], [0], [1], [0, 0, 1, 1], [], []>} : vector<2x64xf32>, vector<64x32xf32>, vector<2x32xf32> -> vector<2x32xf32>
    %34 = arith.addf %33, %17 : vector<2x32xf32>
    %35 = math.tanh %34 : vector<2x32xf32>
    %36 = vector.extract_strided_slice %12 {offsets = [4, 0], sizes = [2, 32], strides = [1, 1]} : vector<16x32xf32> to vector<2x32xf32>
    %cst_20 = arith.constant dense<0.000000e+00> : vector<2x32xf32>
    %37 = tpu.matmul %31, %13, %cst_20 {dimension_numbers = #tpu.dot_dimension_numbers<[1], [0], [0], [1], [0, 0, 1, 1], [], []>} : vector<2x32xf32>, vector<32x32xf32>, vector<2x32xf32> -> vector<2x32xf32>
    %38 = arith.addf %36, %37 : vector<2x32xf32>
    %39 = math.tanh %38 : vector<2x32xf32>
    %40 = tpu.concatenate %39, %35 in 1 : vector<2x32xf32>, vector<2x32xf32> -> vector<2x64xf32>
    %cst_21 = arith.constant dense<0.000000e+00> : vector<2x32xf32>
    %41 = tpu.matmul %40, %14, %cst_21 {dimension_numbers = #tpu.dot_dimension_numbers<[1], [0], [0], [1], [0, 0, 1, 1], [], []>} : vector<2x64xf32>, vector<64x32xf32>, vector<2x32xf32> -> vector<2x32xf32>
    %42 = arith.addf %41, %17 : vector<2x32xf32>
    %43 = math.tanh %42 : vector<2x32xf32>
    %44 = vector.extract_strided_slice %12 {offsets = [6, 0], sizes = [2, 32], strides = [1, 1]} : vector<16x32xf32> to vector<2x32xf32>
    %cst_22 = arith.constant dense<0.000000e+00> : vector<2x32xf32>
    %45 = tpu.matmul %39, %13, %cst_22 {dimension_numbers = #tpu.dot_dimension_numbers<[1], [0], [0], [1], [0, 0, 1, 1], [], []>} : vector<2x32xf32>, vector<32x32xf32>, vector<2x32xf32> -> vector<2x32xf32>
    %46 = arith.addf %44, %45 : vector<2x32xf32>
    %47 = math.tanh %46 : vector<2x32xf32>
    %48 = tpu.concatenate %47, %43 in 1 : vector<2x32xf32>, vector<2x32xf32> -> vector<2x64xf32>
    %cst_23 = arith.constant dense<0.000000e+00> : vector<2x32xf32>
    %49 = tpu.matmul %48, %14, %cst_23 {dimension_numbers = #tpu.dot_dimension_numbers<[1], [0], [0], [1], [0, 0, 1, 1], [], []>} : vector<2x64xf32>, vector<64x32xf32>, vector<2x32xf32> -> vector<2x32xf32>
    %50 = arith.addf %49, %17 : vector<2x32xf32>
    %51 = math.tanh %50 : vector<2x32xf32>
    %52 = vector.extract_strided_slice %12 {offsets = [8, 0], sizes = [2, 32], strides = [1, 1]} : vector<16x32xf32> to vector<2x32xf32>
    %cst_24 = arith.constant dense<0.000000e+00> : vector<2x32xf32>
    %53 = tpu.matmul %47, %13, %cst_24 {dimension_numbers = #tpu.dot_dimension_numbers<[1], [0], [0], [1], [0, 0, 1, 1], [], []>} : vector<2x32xf32>, vector<32x32xf32>, vector<2x32xf32> -> vector<2x32xf32>
    %54 = arith.addf %52, %53 : vector<2x32xf32>
    %55 = math.tanh %54 : vector<2x32xf32>
    %56 = tpu.concatenate %55, %51 in 1 : vector<2x32xf32>, vector<2x32xf32> -> vector<2x64xf32>
    %cst_25 = arith.constant dense<0.000000e+00> : vector<2x32xf32>
    %57 = tpu.matmul %56, %14, %cst_25 {dimension_numbers = #tpu.dot_dimension_numbers<[1], [0], [0], [1], [0, 0, 1, 1], [], []>} : vector<2x64xf32>, vector<64x32xf32>, vector<2x32xf32> -> vector<2x32xf32>
    %58 = arith.addf %57, %17 : vector<2x32xf32>
    %59 = math.tanh %58 : vector<2x32xf32>
    %60 = vector.extract_strided_slice %12 {offsets = [10, 0], sizes = [2, 32], strides = [1, 1]} : vector<16x32xf32> to vector<2x32xf32>
    %cst_26 = arith.constant dense<0.000000e+00> : vector<2x32xf32>
    %61 = tpu.matmul %55, %13, %cst_26 {dimension_numbers = #tpu.dot_dimension_numbers<[1], [0], [0], [1], [0, 0, 1, 1], [], []>} : vector<2x32xf32>, vector<32x32xf32>, vector<2x32xf32> -> vector<2x32xf32>
    %62 = arith.addf %60, %61 : vector<2x32xf32>
    %63 = math.tanh %62 : vector<2x32xf32>
    %64 = tpu.concatenate %63, %59 in 1 : vector<2x32xf32>, vector<2x32xf32> -> vector<2x64xf32>
    %cst_27 = arith.constant dense<0.000000e+00> : vector<2x32xf32>
    %65 = tpu.matmul %64, %14, %cst_27 {dimension_numbers = #tpu.dot_dimension_numbers<[1], [0], [0], [1], [0, 0, 1, 1], [], []>} : vector<2x64xf32>, vector<64x32xf32>, vector<2x32xf32> -> vector<2x32xf32>
    %66 = arith.addf %65, %17 : vector<2x32xf32>
    %67 = math.tanh %66 : vector<2x32xf32>
    %68 = vector.extract_strided_slice %12 {offsets = [12, 0], sizes = [2, 32], strides = [1, 1]} : vector<16x32xf32> to vector<2x32xf32>
    %cst_28 = arith.constant dense<0.000000e+00> : vector<2x32xf32>
    %69 = tpu.matmul %63, %13, %cst_28 {dimension_numbers = #tpu.dot_dimension_numbers<[1], [0], [0], [1], [0, 0, 1, 1], [], []>} : vector<2x32xf32>, vector<32x32xf32>, vector<2x32xf32> -> vector<2x32xf32>
    %70 = arith.addf %68, %69 : vector<2x32xf32>
    %71 = math.tanh %70 : vector<2x32xf32>
    %72 = tpu.concatenate %71, %67 in 1 : vector<2x32xf32>, vector<2x32xf32> -> vector<2x64xf32>
    %cst_29 = arith.constant dense<0.000000e+00> : vector<2x32xf32>
    %73 = tpu.matmul %72, %14, %cst_29 {dimension_numbers = #tpu.dot_dimension_numbers<[1], [0], [0], [1], [0, 0, 1, 1], [], []>} : vector<2x64xf32>, vector<64x32xf32>, vector<2x32xf32> -> vector<2x32xf32>
    %74 = arith.addf %73, %17 : vector<2x32xf32>
    %75 = math.tanh %74 : vector<2x32xf32>
    %76 = vector.extract_strided_slice %12 {offsets = [14, 0], sizes = [2, 32], strides = [1, 1]} : vector<16x32xf32> to vector<2x32xf32>
    %cst_30 = arith.constant dense<0.000000e+00> : vector<2x32xf32>
    %77 = tpu.matmul %71, %13, %cst_30 {dimension_numbers = #tpu.dot_dimension_numbers<[1], [0], [0], [1], [0, 0, 1, 1], [], []>} : vector<2x32xf32>, vector<32x32xf32>, vector<2x32xf32> -> vector<2x32xf32>
    %78 = arith.addf %76, %77 : vector<2x32xf32>
    %79 = math.tanh %78 : vector<2x32xf32>
    %80 = tpu.concatenate %79, %75 in 1 : vector<2x32xf32>, vector<2x32xf32> -> vector<2x64xf32>
    %cst_31 = arith.constant dense<0.000000e+00> : vector<2x32xf32>
    %81 = tpu.matmul %80, %14, %cst_31 {dimension_numbers = #tpu.dot_dimension_numbers<[1], [0], [0], [1], [0, 0, 1, 1], [], []>} : vector<2x64xf32>, vector<64x32xf32>, vector<2x32xf32> -> vector<2x32xf32>
    %82 = arith.addf %81, %17 : vector<2x32xf32>
    %83 = math.tanh %82 : vector<2x32xf32>
    %cst_32 = arith.constant dense<0.000000e+00> : vector<2xf32>
    %84 = vector.multi_reduction <add>, %83, %cst_32 [1] : vector<2x32xf32> to vector<2xf32>
    %85 = vector.shape_cast %84 : vector<2xf32> to vector<2x1xf32>
    %cst_33 = arith.constant 3.200000e+01 : f32
    %86 = vector.broadcast %cst_33 : f32 to vector<2x1xf32>
    %87 = arith.divf %85, %86 : vector<2x1xf32>
    %88 = vector.broadcast %87 : vector<2x1xf32> to vector<2x32xf32>
    %89 = arith.subf %83, %88 : vector<2x32xf32>
    %90 = arith.mulf %89, %89 : vector<2x32xf32>
    %cst_34 = arith.constant dense<0.000000e+00> : vector<2xf32>
    %91 = vector.multi_reduction <add>, %90, %cst_34 [1] : vector<2x32xf32> to vector<2xf32>
    %92 = vector.shape_cast %91 : vector<2xf32> to vector<2x1xf32>
    %cst_35 = arith.constant 3.200000e+01 : f32
    %93 = vector.broadcast %cst_35 : f32 to vector<2x1xf32>
    %94 = arith.divf %92, %93 : vector<2x1xf32>
    %95 = vector.broadcast %87 : vector<2x1xf32> to vector<2x32xf32>
    %96 = arith.subf %83, %95 : vector<2x32xf32>
    %cst_36 = arith.constant 9.99999974E-6 : f32
    %97 = vector.broadcast %cst_36 : f32 to vector<2x1xf32>
    %98 = arith.addf %94, %97 : vector<2x1xf32>
    %99 = math.rsqrt %98 : vector<2x1xf32>
    %100 = vector.broadcast %99 : vector<2x1xf32> to vector<2x32xf32>
    %101 = arith.mulf %96, %100 : vector<2x32xf32>
    %c0_37 = arith.constant 0 : index
    %c0_38 = arith.constant 0 : index
    %102 = vector.load %arg7[%c0_37, %c0_38] : memref<1x32xf32, #tpu.memory_space<vmem>>, vector<1x32xf32>
    %103 = vector.broadcast %102 : vector<1x32xf32> to vector<2x32xf32>
    %104 = arith.mulf %101, %103 : vector<2x32xf32>
    %c0_39 = arith.constant 0 : index
    %c0_40 = arith.constant 0 : index
    %105 = vector.load %arg8[%c0_39, %c0_40] : memref<1x32xf32, #tpu.memory_space<vmem>>, vector<1x32xf32>
    %106 = vector.broadcast %105 : vector<1x32xf32> to vector<2x32xf32>
    %107 = arith.addf %104, %106 : vector<2x32xf32>
    %c0_41 = arith.constant 0 : index
    %c0_42 = arith.constant 0 : index
    %108 = vector.load %arg9[%c0_41, %c0_42] : memref<32x16xf32, #tpu.memory_space<vmem>>, vector<32x16xf32>
    %cst_43 = arith.constant dense<0.000000e+00> : vector<2x16xf32>
    %109 = tpu.matmul %107, %108, %cst_43 {dimension_numbers = #tpu.dot_dimension_numbers<[1], [0], [0], [1], [0, 0, 1, 1], [], []>} : vector<2x32xf32>, vector<32x16xf32>, vector<2x16xf32> -> vector<2x16xf32>
    %c0_44 = arith.constant 0 : index
    %c0_45 = arith.constant 0 : index
    %110 = vector.load %arg10[%c0_44, %c0_45] : memref<1x16xf32, #tpu.memory_space<vmem>>, vector<1x16xf32>
    %111 = vector.broadcast %110 : vector<1x16xf32> to vector<2x16xf32>
    %112 = arith.addf %109, %111 : vector<2x16xf32>
    %cst_46 = arith.constant 0.000000e+00 : f32
    %113 = vector.broadcast %cst_46 : f32 to vector<2x16xf32>
    %114 = arith.maximumf %112, %113 : vector<2x16xf32>
    %c0_47 = arith.constant 0 : index
    %c0_48 = arith.constant 0 : index
    %115 = vector.load %arg11[%c0_47, %c0_48] : memref<16x3xf32, #tpu.memory_space<vmem>>, vector<16x3xf32>
    %cst_49 = arith.constant dense<0.000000e+00> : vector<2x3xf32>
    %116 = tpu.matmul %114, %115, %cst_49 {dimension_numbers = #tpu.dot_dimension_numbers<[1], [0], [0], [1], [0, 0, 1, 1], [], []>} : vector<2x16xf32>, vector<16x3xf32>, vector<2x3xf32> -> vector<2x3xf32>
    %c0_50 = arith.constant 0 : index
    %c0_51 = arith.constant 0 : index
    %117 = vector.load %arg12[%c0_50, %c0_51] : memref<1x3xf32, #tpu.memory_space<vmem>>, vector<1x3xf32>
    %118 = vector.broadcast %117 : vector<1x3xf32> to vector<2x3xf32>
    %119 = arith.addf %116, %118 : vector<2x3xf32>
    %c0_52 = arith.constant 0 : index
    %c0_53 = arith.constant 0 : index
    %120 = vector.load %arg13[%c0_52, %c0_53] : memref<2x3xf32, #tpu.memory_space<vmem>>, vector<2x3xf32>
    tpu.vector_store %arg13[%c0_52, %c0_53], %119 {strides = array<i32>} : memref<2x3xf32, #tpu.memory_space<vmem>>, vector<2x3xf32>,
    return
  }
}

</mosaic_0001>

<llo_original>
// kernel: sentiment_forward.1
$region0: #{sentiment_forward.1}
  #allocation0 [shape = 'u32[]', space=smem, size = 0x4, offset = 0x4, fixed_abs, tag = 'smem constant byte address 0x4 - core index']
  #allocation1 [shape = 'u32[144,128]{1,0:T(1,128)}', space=vmem, size = 0x12000, scoped, tag = 'internal scratch']
  %s0 = inlined_call_operand.vmem [shape: s32[16,1], index: 0, kind: input, shape index: {}]
  %s1 = inlined_call_operand.vmem [shape: f32[100,32], index: 1, kind: input, shape index: {}]
  %s2 = inlined_call_operand.vmem [shape: f32[32,32], index: 2, kind: input, shape index: {}]
  %s3 = inlined_call_operand.vmem [shape: f32[32,32], index: 3, kind: input, shape index: {}]
  %s4 = inlined_call_operand.vmem [shape: f32[1,32], index: 4, kind: input, shape index: {}]
  %s5 = inlined_call_operand.vmem [shape: f32[64,32], index: 5, kind: input, shape index: {}]
  %s6 = inlined_call_operand.vmem [shape: f32[1,32], index: 6, kind: input, shape index: {}]
  %s7 = inlined_call_operand.vmem [shape: f32[1,32], index: 7, kind: input, shape index: {}]
  %s8 = inlined_call_operand.vmem [shape: f32[1,32], index: 8, kind: input, shape index: {}]
  %s9 = inlined_call_operand.vmem [shape: f32[32,16], index: 9, kind: input, shape index: {}]
  %s10 = inlined_call_operand.vmem [shape: f32[1,16], index: 10, kind: input, shape index: {}]
  %s11 = inlined_call_operand.vmem [shape: f32[16,3], index: 11, kind: input, shape index: {}]
  %s12 = inlined_call_operand.vmem [shape: f32[1,3], index: 12, kind: input, shape index: {}]
  %s13 = inlined_call_operand.hbm [shape: f32[2,3], index: 13, kind: output, shape index: {}]
  %s14 = sld [smem:[#allocation0]]
  $region62: #{sentiment_forward.1} parent=0
    _
  %s16 = ssub.s32 1, %s14
  %s17 = scalar_select 0, %s16, %s14
  $region1: #{sentiment_forward.1} parent=0
    #allocation2 [shape = 'u8[1024]{0}', space=vmem, size = 0x400, scoped, tag = 'output window, operand 0, single buffered']
    #allocation3 [shape = 's32[1]{0}', space=sflag, size = 0x4, scoped, tag = 'scoped memory for sentiment_forward.1']
    %18 = vsyncpa [#allocation3], 0
    // Predicated region
    $region2: #{sentiment_forward.1} parent=1 // pred_check
      _
    $region3: #{sentiment_forward.1} parent=1 // pred_check_branch
      %20 = sbr.rel (0) target = $region5
    $region4: #{sentiment_forward.1} parent=1 // pred_region
      _
    $region5: #{sentiment_forward.1} parent=1 // pred_fallthru
      _
    // Predicated region
    $region6: #{sentiment_forward.1} parent=1 // pred_check
      _
    $region7: #{sentiment_forward.1} parent=1 // pred_check_branch
      %22 = sbr.rel (0) target = $region9
    $region8: #{sentiment_forward.1} parent=1 // pred_region
      _
    $region9: #{sentiment_forward.1} parent=1 // pred_fallthru
      _
    // Predicated region
    $region10: #{sentiment_forward.1} parent=1 // pred_check
      _
    $region11: #{sentiment_forward.1} parent=1 // pred_check_branch
      %24 = sbr.rel (0) target = $region13
    $region12: #{sentiment_forward.1} parent=1 // pred_region
      _
    $region13: #{sentiment_forward.1} parent=1 // pred_fallthru
      _
    // Predicated region
    $region14: #{sentiment_forward.1} parent=1 // pred_check
      _
    $region15: #{sentiment_forward.1} parent=1 // pred_check_branch
      %26 = sbr.rel (0) target = $region17
    $region16: #{sentiment_forward.1} parent=1 // pred_region
      _
    $region17: #{sentiment_forward.1} parent=1 // pred_fallthru
      _
    // Predicated region
    $region18: #{sentiment_forward.1} parent=1 // pred_check
      _
    $region19: #{sentiment_forward.1} parent=1 // pred_check_branch
      %28 = sbr.rel (0) target = $region21
    $region20: #{sentiment_forward.1} parent=1 // pred_region
      _
    $region21: #{sentiment_forward.1} parent=1 // pred_fallthru
      _
    // Predicated region
    $region22: #{sentiment_forward.1} parent=1 // pred_check
      _
    $region23: #{sentiment_forward.1} parent=1 // pred_check_branch
      %30 = sbr.rel (0) target = $region25
    $region24: #{sentiment_forward.1} parent=1 // pred_region
      _
    $region25: #{sentiment_forward.1} parent=1 // pred_fallthru
      _
    // Predicated region
    $region26: #{sentiment_forward.1} parent=1 // pred_check
      _
    $region27: #{sentiment_forward.1} parent=1 // pred_check_branch
      %32 = sbr.rel (0) target = $region29
    $region28: #{sentiment_forward.1} parent=1 // pred_region
      _
    $region29: #{sentiment_forward.1} parent=1 // pred_fallthru
      _
    // Predicated region
    $region30: #{sentiment_forward.1} parent=1 // pred_check
      _
    $region31: #{sentiment_forward.1} parent=1 // pred_check_branch
      %34 = sbr.rel (0) target = $region33
    $region32: #{sentiment_forward.1} parent=1 // pred_region
      _
    $region33: #{sentiment_forward.1} parent=1 // pred_fallthru
      _
    // Predicated region
    $region34: #{sentiment_forward.1} parent=1 // pred_check
      _
    $region35: #{sentiment_forward.1} parent=1 // pred_check_branch
      %36 = sbr.rel (0) target = $region37
    $region36: #{sentiment_forward.1} parent=1 // pred_region
      _
    $region37: #{sentiment_forward.1} parent=1 // pred_fallthru
      _
    // Predicated region
    $region38: #{sentiment_forward.1} parent=1 // pred_check
      _
    $region39: #{sentiment_forward.1} parent=1 // pred_check_branch
      %38 = sbr.rel (0) target = $region41
    $region40: #{sentiment_forward.1} parent=1 // pred_region
      _
    $region41: #{sentiment_forward.1} parent=1 // pred_fallthru
      _
    // Predicated region
    $region42: #{sentiment_forward.1} parent=1 // pred_check
      _
    $region43: #{sentiment_forward.1} parent=1 // pred_check_branch
      %40 = sbr.rel (0) target = $region45
    $region44: #{sentiment_forward.1} parent=1 // pred_region
      _
    $region45: #{sentiment_forward.1} parent=1 // pred_fallthru
      _
    // Predicated region
    $region46: #{sentiment_forward.1} parent=1 // pred_check
      _
    $region47: #{sentiment_forward.1} parent=1 // pred_check_branch
      %42 = sbr.rel (0) target = $region49
    $region48: #{sentiment_forward.1} parent=1 // pred_region
      _
    $region49: #{sentiment_forward.1} parent=1 // pred_fallthru
      _
    // Predicated region
    $region50: #{sentiment_forward.1} parent=1 // pred_check
      _
    $region51: #{sentiment_forward.1} parent=1 // pred_check_branch
      %44 = sbr.rel (0) target = $region53
    $region52: #{sentiment_forward.1} parent=1 // pred_region
      _
    $region53: #{sentiment_forward.1} parent=1 // pred_fallthru
      _
    %v45 = vld [vmem:[%s0] sm:$0xff]
    %v46 = vld [vmem:[%s0 + $0x8] sm:$0xff]
    %v47 = vlaneseq
    %v48 = vand.u32 %v47, 127
    %49 = vset.pattern.permute.xlu0 0
    %50 = vperm.xlu0 %49, %v45
    %v51 = vpop.permute.xlu0 %50
    %52 = vset.pattern.permute.xlu0 0
    %53 = vperm.xlu0 %52, %v46
    %v54 = vpop.permute.xlu0 %53
    %vm55 = vcmp.eq.s32.totalorder %v48, %v51
    %vm56 = vcmp.eq.s32.totalorder %v48, %v54
    %v57 = vsel %vm55, 1, 0
    %v58 = vsel %vm56, 1, 0
    %v59 = vcvt.s32.f32 %v57
    %v60 = vcvt.s32.f32 %v58
    %v61 = vld [vmem:[%s1] sm:$0xff]
    %v62 = vld [vmem:[%s1 + $0x8] sm:$0xff]
    %v63 = vld [vmem:[%s1 + $0x10] sm:$0xff]
    %v64 = vld [vmem:[%s1 + $0x18] sm:$0xff]
    %v65 = vld [vmem:[%s1 + $0x20] sm:$0xff]
    %v66 = vld [vmem:[%s1 + $0x28] sm:$0xff]
    %v67 = vld [vmem:[%s1 + $0x30] sm:$0xff]
    %v68 = vld [vmem:[%s1 + $0x38] sm:$0xff]
    %v69 = vld [vmem:[%s1 + $0x40] sm:$0xff]
    %v70 = vld [vmem:[%s1 + $0x48] sm:$0xff]
    %v71 = vld [vmem:[%s1 + $0x50] sm:$0xff]
    %v72 = vld [vmem:[%s1 + $0x58] sm:$0xff]
    %v73 = vld [vmem:[%s1 + $0x60] sm:$0xf]
    %vm74 = vcmask 818176
    %v76 = vsel %vm74, %v59, 0
    %v79 = vsel %vm74, %v60, 0
    %vm81 = vcmask 1043456
    %v83 = vsel %vm81, %v73, 0
    %85 = vmatprep.subr.mxu0 0.0
    %86 = vmatpush1.msra.mxu0 %v61
    %87 = vmatprep.subr.mxu0 0.0
    %88 = vmatpush1.msra.mxu0 %v62
    %89 = vmatprep.subr.mxu0 0.0
    %90 = vmatpush1.msra.mxu0 %v63
    %91 = vmatprep.subr.mxu0 0.0
    %92 = vmatpush1.msra.mxu0 %v64
    %93 = vmatprep.subr.mxu0 0.0
    %94 = vmatpush1.msra.mxu0 %v65
    %95 = vmatprep.subr.mxu0 0.0
    %96 = vmatpush1.msra.mxu0 %v66
    %97 = vmatprep.subr.mxu0 0.0
    %98 = vmatpush1.msra.mxu0 %v67
    %99 = vmatprep.subr.mxu0 0.0
    %100 = vmatpush1.msra.mxu0 %v68
    %101 = vmatprep.subr.mxu0 0.0
    %102 = vmatpush1.msra.mxu0 %v69
    %103 = vmatprep.subr.mxu0 0.0
    %104 = vmatpush1.msra.mxu0 %v70
    %105 = vmatprep.subr.mxu0 0.0
    %106 = vmatpush1.msra.mxu0 %v71
    %107 = vmatprep.subr.mxu0 0.0
    %108 = vmatpush1.msra.mxu0 %v72
    %109 = vmatprep.subr.mxu0 0.0
    %110 = vmatpush1.msra.mxu0 %v83
    %111 = vmatprep.subr.mxu0 0.0
    %112 = vmatpush1.msra.mxu0 0.0
    %113 = vmatprep.subr.mxu0 0.0
    %114 = vmatpush1.msra.mxu0 0.0
    %115 = vmatprep.subr.mxu0 0.0
    %116 = vmatpush1.msra.mxu0 0.0
    %117 = vmatprep.subr.mxu0 0.0
    %118 = vmatpush1.msra.mxu0 0.0
    %119 = vmatprep.subr.mxu0 0.0
    %120 = vmatpush1.msra.mxu0 0.0
    %121 = vmatprep.subr.mxu0 0.0
    %122 = vmatpush1.msra.mxu0 0.0
    %123 = vmatprep.subr.mxu0 0.0
    %124 = vmatpush1.msra.mxu0 0.0
    %125 = vmatprep.subr.mxu0 0.0
    %126 = vmatpush1.msra.mxu0 0.0
    %127 = vmatprep.subr.mxu0 0.0
    %128 = vmatpush1.msra.mxu0 0.0
    %129 = vmatprep.subr.mxu0 0.0
    %130 = vmatpush1.msra.mxu0 0.0
    %131 = vmatprep.subr.mxu0 0.0
    %132 = vmatpush1.msra.mxu0 0.0
    %133 = vmatprep.subr.mxu0 0.0
    %134 = vmatpush1.msra.mxu0 0.0
    %135 = vmatprep.subr.mxu0 0.0
    %136 = vmatpush1.msra.mxu0 0.0
    %137 = vmatprep.subr.mxu0 0.0
    %138 = vmatpush1.msra.mxu0 0.0
    %139 = vmatprep.subr.mxu0 0.0
    %140 = vmatpush1.msra.mxu0 0.0
    %141 = vmatprep.subr.mxu0 0.0
    %142 = vmatpush1.msra.mxu0 0.0
    %143 = vmatprep.subr.mxu0 0.0
    %144 = vmatpush1.msra.mxu0 0.0
    %145 = vmatprep.subr.mxu0 0.0
    %146 = vmatpush1.msra.mxu0 0.0
    %147 = vmatprep.subr.mxu0 0.0
    %148 = vmatpush1.msra.mxu0 0.0
    %149 = vmatprep.mubr.f32.mxu0 0.0
    %150 = vmatmul.mubr.f32.gmra.mrb[0].mxu0 %v76
    %v151 = vpop.f32.mrb[0].mxu0
    %v152 = vadd.f32 0.0, %v151
    %v153 = vpop.f32.mrb[0].mxu0
    %154 = vmatprep.mubr.f32.mxu0 0.0
    %155 = vmatmul.mubr.f32.gmra.mrb[0].mxu0 %v79
    %v156 = vpop.f32.mrb[0].mxu0
    %v157 = vadd.f32 0.0, %v156
    %v158 = vpop.f32.mrb[0].mxu0
    %159 = vdwg.mxu0
    %v160 = vld [vmem:[%s2] sm:$0xff]
    %v161 = vld [vmem:[%s2 + $0x8] sm:$0xff]
    %v162 = vld [vmem:[%s2 + $0x10] sm:$0xff]
    %v163 = vld [vmem:[%s2 + $0x18] sm:$0xff]
    %v164 = vld [vmem:[%s4] sm:$0x1]
    %v166 = vlaneseq
    %v167 = vshrl.u32 %v166, 7
    %v168 = vsub.s32 0, %v167
    %v169 = vrot.slane %v164, %v168
    %vm171 = vcmask 261120
    %v173 = vsel %vm171, %v152, 0
    %v176 = vsel %vm171, %v157, 0
    %178 = vmatprep.subr.mxu0 0.0
    %179 = vmatpush1.msra.mxu0 %v160
    %180 = vmatprep.subr.mxu0 0.0
    %181 = vmatpush1.msra.mxu0 %v161
    %182 = vmatprep.subr.mxu0 0.0
    %183 = vmatpush1.msra.mxu0 %v162
    %184 = vmatprep.subr.mxu0 0.0
    %185 = vmatpush1.msra.mxu0 %v163
    %186 = vmatprep.subr.mxu0 0.0
    %187 = vmatpush1.msra.mxu0 0.0
    %188 = vmatprep.subr.mxu0 0.0
    %189 = vmatpush1.msra.mxu0 0.0
    %190 = vmatprep.subr.mxu0 0.0
    %191 = vmatpush1.msra.mxu0 0.0
    %192 = vmatprep.subr.mxu0 0.0
    %193 = vmatpush1.msra.mxu0 0.0
    %194 = vmatprep.subr.mxu0 0.0
    %195 = vmatpush1.msra.mxu0 0.0
    %196 = vmatprep.subr.mxu0 0.0
    %197 = vmatpush1.msra.mxu0 0.0
    %198 = vmatprep.subr.mxu0 0.0
    %199 = vmatpush1.msra.mxu0 0.0
    %200 = vmatprep.subr.mxu0 0.0
    %201 = vmatpush1.msra.mxu0 0.0
    %202 = vmatprep.subr.mxu0 0.0
    %203 = vmatpush1.msra.mxu0 0.0
    %204 = vmatprep.subr.mxu0 0.0
    %205 = vmatpush1.msra.mxu0 0.0
    %206 = vmatprep.subr.mxu0 0.0
    %207 = vmatpush1.msra.mxu0 0.0
    %208 = vmatprep.subr.mxu0 0.0
    %209 = vmatpush1.msra.mxu0 0.0
    %210 = vmatprep.subr.mxu0 0.0
    %211 = vmatpush1.msra.mxu0 0.0
    %212 = vmatprep.subr.mxu0 0.0
    %213 = vmatpush1.msra.mxu0 0.0
    %214 = vmatprep.subr.mxu0 0.0
    %215 = vmatpush1.msra.mxu0 0.0
    %216 = vmatprep.subr.mxu0 0.0
    %217 = vmatpush1.msra.mxu0 0.0
    %218 = vmatprep.subr.mxu0 0.0
    %219 = vmatpush1.msra.mxu0 0.0
    %220 = vmatprep.subr.mxu0 0.0
    %221 = vmatpush1.msra.mxu0 0.0
    %222 = vmatprep.subr.mxu0 0.0
    %223 = vmatpush1.msra.mxu0 0.0
    %224 = vmatprep.subr.mxu0 0.0
    %225 = vmatpush1.msra.mxu0 0.0
    %226 = vmatprep.subr.mxu0 0.0
    %227 = vmatpush1.msra.mxu0 0.0
    %228 = vmatprep.subr.mxu0 0.0
    %229 = vmatpush1.msra.mxu0 0.0
    %230 = vmatprep.subr.mxu0 0.0
    %231 = vmatpush1.msra.mxu0 0.0
    %232 = vmatprep.subr.mxu0 0.0
    %233 = vmatpush1.msra.mxu0 0.0
    %234 = vmatprep.subr.mxu0 0.0
    %235 = vmatpush1.msra.mxu0 0.0
    %236 = vmatprep.subr.mxu0 0.0
    %237 = vmatpush1.msra.mxu0 0.0
    %238 = vmatprep.subr.mxu0 0.0
    %239 = vmatpush1.msra.mxu0 0.0
    %240 = vmatprep.subr.mxu0 0.0
    %241 = vmatpush1.msra.mxu0 0.0
    %242 = vmatprep.mubr.f32.mxu0 0.0
    %243 = vmatmul.mubr.f32.gmra.mrb[0].mxu0 %v173
    %v244 = vpop.f32.mrb[0].mxu0
    %v245 = vadd.f32 %v169, %v244
    %v246 = vpop.f32.mrb[0].mxu0
    %247 = vmatprep.mubr.f32.mxu0 0.0
    %248 = vmatmul.mubr.f32.gmra.mrb[0].mxu0 %v176
    %v249 = vpop.f32.mrb[0].mxu0
    %v250 = vadd.f32 %v169, %v249
    %v251 = vpop.f32.mrb[0].mxu0
    %252 = vdwg.mxu0
    %v253 = vld [vmem:[%s3] sm:$0xff]
    %v254 = vld [vmem:[%s3 + $0x8] sm:$0xff]
    %v255 = vld [vmem:[%s3 + $0x10] sm:$0xff]
    %v256 = vld [vmem:[%s3 + $0x18] sm:$0xff]
    %v257 = vld [vmem:[%s5] sm:$0xff]
    %v258 = vld [vmem:[%s5 + $0x8] sm:$0xff]
    %v259 = vld [vmem:[%s5 + $0x10] sm:$0xff]
    %v260 = vld [vmem:[%s5 + $0x18] sm:$0xff]
    %v261 = vld [vmem:[%s5 + $0x20] sm:$0xff]
    %v262 = vld [vmem:[%s5 + $0x28] sm:$0xff]
    %v263 = vld [vmem:[%s5 + $0x30] sm:$0xff]
    %v264 = vld [vmem:[%s5 + $0x38] sm:$0xff]
    %v265 = vld [vmem:[%s6] sm:$0x1]
    %v267 = vlaneseq
    %v268 = vshrl.u32 %v267, 7
    %v269 = vsub.s32 0, %v268
    %v270 = vrot.slane %v265, %v269
    %v273 = vsel %vm171, 0.0, 0
    %275 = vmatprep.subr.mxu0 0.0
    %276 = vmatpush1.msra.mxu0 %v253
    %277 = vmatprep.subr.mxu0 0.0
    %278 = vmatpush1.msra.mxu0 %v254
    %279 = vmatprep.subr.mxu0 0.0
    %280 = vmatpush1.msra.mxu0 %v255
    %281 = vmatprep.subr.mxu0 0.0
    %282 = vmatpush1.msra.mxu0 %v256
    %283 = vmatprep.subr.mxu0 0.0
    %284 = vmatpush1.msra.mxu0 0.0
    %285 = vmatprep.subr.mxu0 0.0
    %286 = vmatpush1.msra.mxu0 0.0
    %287 = vmatprep.subr.mxu0 0.0
    %288 = vmatpush1.msra.mxu0 0.0
    %289 = vmatprep.subr.mxu0 0.0
    %290 = vmatpush1.msra.mxu0 0.0
    %291 = vmatprep.subr.mxu0 0.0
    %292 = vmatpush1.msra.mxu0 0.0
    %293 = vmatprep.subr.mxu0 0.0
    %294 = vmatpush1.msra.mxu0 0.0
    %295 = vmatprep.subr.mxu0 0.0
    %296 = vmatpush1.msra.mxu0 0.0
    %297 = vmatprep.subr.mxu0 0.0
    %298 = vmatpush1.msra.mxu0 0.0
    %299 = vmatprep.subr.mxu0 0.0
    %300 = vmatpush1.msra.mxu0 0.0
    %301 = vmatprep.subr.mxu0 0.0
    %302 = vmatpush1.msra.mxu0 0.0
    %303 = vmatprep.subr.mxu0 0.0
    %304 = vmatpush1.msra.mxu0 0.0
    %305 = vmatprep.subr.mxu0 0.0
    %306 = vmatpush1.msra.mxu0 0.0
    %307 = vmatprep.subr.mxu0 0.0
    %308 = vmatpush1.msra.mxu0 0.0
    %309 = vmatprep.subr.mxu0 0.0
    %310 = vmatpush1.msra.mxu0 0.0
    %311 = vmatprep.subr.mxu0 0.0
    %312 = vmatpush1.msra.mxu0 0.0
    %313 = vmatprep.subr.mxu0 0.0
    %314 = vmatpush1.msra.mxu0 0.0
    %315 = vmatprep.subr.mxu0 0.0
    %316 = vmatpush1.msra.mxu0 0.0
    %317 = vmatprep.subr.mxu0 0.0
    %318 = vmatpush1.msra.mxu0 0.0
    %319 = vmatprep.subr.mxu0 0.0
    %320 = vmatpush1.msra.mxu0 0.0
    %321 = vmatprep.subr.mxu0 0.0
    %322 = vmatpush1.msra.mxu0 0.0
    %323 = vmatprep.subr.mxu0 0.0
    %324 = vmatpush1.msra.mxu0 0.0
    %325 = vmatprep.subr.mxu0 0.0
    %326 = vmatpush1.msra.mxu0 0.0
    %327 = vmatprep.subr.mxu0 0.0
    %328 = vmatpush1.msra.mxu0 0.0
    %329 = vmatprep.subr.mxu0 0.0
    %330 = vmatpush1.msra.mxu0 0.0
    %331 = vmatprep.subr.mxu0 0.0
    %332 = vmatpush1.msra.mxu0 0.0
    %333 = vmatprep.subr.mxu0 0.0
    %334 = vmatpush1.msra.mxu0 0.0
    %335 = vmatprep.subr.mxu0 0.0
    %336 = vmatpush1.msra.mxu0 0.0
    %337 = vmatprep.subr.mxu0 0.0
    %338 = vmatpush1.msra.mxu0 0.0
    %339 = vmatprep.mubr.f32.mxu0 0.0
    %340 = vmatmul.mubr.f32.gmra.mrb[0].mxu0 %v273
    %v341 = vpop.f32.mrb[0].mxu0
    %v342 = vadd.f32 0.0, %v341
    %v343 = vpop.f32.mrb[0].mxu0
    %344 = vdwg.mxu0
    %v345 = vadd.f32 %v245, %v342
    %v346 = vtanh.pop %v345
    %v347 = vsel %vm171, %v346, 0.0
    %vm348 = vcmask 523264
    %v350 = vsel %vm348, %v347, 0
    %352 = vmatprep.subr.mxu0 0.0
    %353 = vmatpush1.msra.mxu0 %v257
    %354 = vmatprep.subr.mxu0 0.0
    %355 = vmatpush1.msra.mxu0 %v258
    %356 = vmatprep.subr.mxu0 0.0
    %357 = vmatpush1.msra.mxu0 %v259
    %358 = vmatprep.subr.mxu0 0.0
    %359 = vmatpush1.msra.mxu0 %v260
    %360 = vmatprep.subr.mxu0 0.0
    %361 = vmatpush1.msra.mxu0 %v261
    %362 = vmatprep.subr.mxu0 0.0
    %363 = vmatpush1.msra.mxu0 %v262
    %364 = vmatprep.subr.mxu0 0.0
    %365 = vmatpush1.msra.mxu0 %v263
    %366 = vmatprep.subr.mxu0 0.0
    %367 = vmatpush1.msra.mxu0 %v264
    %368 = vmatprep.subr.mxu0 0.0
    %369 = vmatpush1.msra.mxu0 0.0
    %370 = vmatprep.subr.mxu0 0.0
    %371 = vmatpush1.msra.mxu0 0.0
    %372 = vmatprep.subr.mxu0 0.0
    %373 = vmatpush1.msra.mxu0 0.0
    %374 = vmatprep.subr.mxu0 0.0
    %375 = vmatpush1.msra.mxu0 0.0
    %376 = vmatprep.subr.mxu0 0.0
    %377 = vmatpush1.msra.mxu0 0.0
    %378 = vmatprep.subr.mxu0 0.0
    %379 = vmatpush1.msra.mxu0 0.0
    %380 = vmatprep.subr.mxu0 0.0
    %381 = vmatpush1.msra.mxu0 0.0
    %382 = vmatprep.subr.mxu0 0.0
    %383 = vmatpush1.msra.mxu0 0.0
    %384 = vmatprep.subr.mxu0 0.0
    %385 = vmatpush1.msra.mxu0 0.0
    %386 = vmatprep.subr.mxu0 0.0
    %387 = vmatpush1.msra.mxu0 0.0
    %388 = vmatprep.subr.mxu0 0.0
    %389 = vmatpush1.msra.mxu0 0.0
    %390 = vmatprep.subr.mxu0 0.0
    %391 = vmatpush1.msra.mxu0 0.0
    %392 = vmatprep.subr.mxu0 0.0
    %393 = vmatpush1.msra.mxu0 0.0
    %394 = vmatprep.subr.mxu0 0.0
    %395 = vmatpush1.msra.mxu0 0.0
    %396 = vmatprep.subr.mxu0 0.0
    %397 = vmatpush1.msra.mxu0 0.0
    %398 = vmatprep.subr.mxu0 0.0
    %399 = vmatpush1.msra.mxu0 0.0
    %400 = vmatprep.subr.mxu0 0.0
    %401 = vmatpush1.msra.mxu0 0.0
    %402 = vmatprep.subr.mxu0 0.0
    %403 = vmatpush1.msra.mxu0 0.0
    %404 = vmatprep.subr.mxu0 0.0
    %405 = vmatpush1.msra.mxu0 0.0
    %406 = vmatprep.subr.mxu0 0.0
    %407 = vmatpush1.msra.mxu0 0.0
    %408 = vmatprep.subr.mxu0 0.0
    %409 = vmatpush1.msra.mxu0 0.0
    %410 = vmatprep.subr.mxu0 0.0
    %411 = vmatpush1.msra.mxu0 0.0
    %412 = vmatprep.subr.mxu0 0.0
    %413 = vmatpush1.msra.mxu0 0.0
    %414 = vmatprep.subr.mxu0 0.0
    %415 = vmatpush1.msra.mxu0 0.0
    %416 = vmatprep.mubr.f32.mxu0 0.0
    %417 = vmatmul.mubr.f32.gmra.mrb[0].mxu0 %v350
    %v418 = vpop.f32.mrb[0].mxu0
    %v419 = vadd.f32 %v270, %v418
    %v420 = vpop.f32.mrb[0].mxu0
    %421 = vdwg.mxu0
    %v422 = vtanh.pop %v419
    %v424 = vsel %vm171, %v346, 0
    %426 = vmatprep.subr.mxu0 0.0
    %427 = vmatpush1.msra.mxu0 %v253
    %428 = vmatprep.subr.mxu0 0.0
    %429 = vmatpush1.msra.mxu0 %v254
    %430 = vmatprep.subr.mxu0 0.0
    %431 = vmatpush1.msra.mxu0 %v255
    %432 = vmatprep.subr.mxu0 0.0
    %433 = vmatpush1.msra.mxu0 %v256
    %434 = vmatprep.subr.mxu0 0.0
    %435 = vmatpush1.msra.mxu0 0.0
    %436 = vmatprep.subr.mxu0 0.0
    %437 = vmatpush1.msra.mxu0 0.0
    %438 = vmatprep.subr.mxu0 0.0
    %439 = vmatpush1.msra.mxu0 0.0
    %440 = vmatprep.subr.mxu0 0.0
    %441 = vmatpush1.msra.mxu0 0.0
    %442 = vmatprep.subr.mxu0 0.0
    %443 = vmatpush1.msra.mxu0 0.0
    %444 = vmatprep.subr.mxu0 0.0
    %445 = vmatpush1.msra.mxu0 0.0
    %446 = vmatprep.subr.mxu0 0.0
    %447 = vmatpush1.msra.mxu0 0.0
    %448 = vmatprep.subr.mxu0 0.0
    %449 = vmatpush1.msra.mxu0 0.0
    %450 = vmatprep.subr.mxu0 0.0
    %451 = vmatpush1.msra.mxu0 0.0
    %452 = vmatprep.subr.mxu0 0.0
    %453 = vmatpush1.msra.mxu0 0.0
    %454 = vmatprep.subr.mxu0 0.0
    %455 = vmatpush1.msra.mxu0 0.0
    %456 = vmatprep.subr.mxu0 0.0
    %457 = vmatpush1.msra.mxu0 0.0
    %458 = vmatprep.subr.mxu0 0.0
    %459 = vmatpush1.msra.mxu0 0.0
    %460 = vmatprep.subr.mxu0 0.0
    %461 = vmatpush1.msra.mxu0 0.0
    %462 = vmatprep.subr.mxu0 0.0
    %463 = vmatpush1.msra.mxu0 0.0
    %464 = vmatprep.subr.mxu0 0.0
    %465 = vmatpush1.msra.mxu0 0.0
    %466 = vmatprep.subr.mxu0 0.0
    %467 = vmatpush1.msra.mxu0 0.0
    %468 = vmatprep.subr.mxu0 0.0
    %469 = vmatpush1.msra.mxu0 0.0
    %470 = vmatprep.subr.mxu0 0.0
    %471 = vmatpush1.msra.mxu0 0.0
    %472 = vmatprep.subr.mxu0 0.0
    %473 = vmatpush1.msra.mxu0 0.0
    %474 = vmatprep.subr.mxu0 0.0
    %475 = vmatpush1.msra.mxu0 0.0
    %476 = vmatprep.subr.mxu0 0.0
    %477 = vmatpush1.msra.mxu0 0.0
    %478 = vmatprep.subr.mxu0 0.0
    %479 = vmatpush1.msra.mxu0 0.0
    %480 = vmatprep.subr.mxu0 0.0
    %481 = vmatpush1.msra.mxu0 0.0
    %482 = vmatprep.subr.mxu0 0.0
    %483 = vmatpush1.msra.mxu0 0.0
    %484 = vmatprep.subr.mxu0 0.0
    %485 = vmatpush1.msra.mxu0 0.0
    %486 = vmatprep.subr.mxu0 0.0
    %487 = vmatpush1.msra.mxu0 0.0
    %488 = vmatprep.subr.mxu0 0.0
    %489 = vmatpush1.msra.mxu0 0.0
    %490 = vmatprep.mubr.f32.mxu0 0.0
    %491 = vmatmul.mubr.f32.gmra.mrb[0].mxu0 %v424
    %v492 = vpop.f32.mrb[0].mxu0
    %v493 = vadd.f32 0.0, %v492
    %v494 = vpop.f32.mrb[0].mxu0
    %495 = vdwg.mxu0
    %v497 = vrot.slane %v493, 6
    %v499 = vadd.f32 %v245, %v497
    %v500 = vtanh.pop %v499
    %v502 = vrot.slane %v422, 6
    %503 = vrot.lane.b32.xlu0 %v502, 32
    %v504 = vpop.permute.xlu0 %503
    %v506 = vsel %vm171, %v500, %v504
    %v508 = vrot.slane %v506, 2
    %v509 = vsel %vm348, %v508, 0
    %511 = vmatprep.subr.mxu0 0.0
    %512 = vmatpush1.msra.mxu0 %v257
    %513 = vmatprep.subr.mxu0 0.0
    %514 = vmatpush1.msra.mxu0 %v258
    %515 = vmatprep.subr.mxu0 0.0
    %516 = vmatpush1.msra.mxu0 %v259
    %517 = vmatprep.subr.mxu0 0.0
    %518 = vmatpush1.msra.mxu0 %v260
    %519 = vmatprep.subr.mxu0 0.0
    %520 = vmatpush1.msra.mxu0 %v261
    %521 = vmatprep.subr.mxu0 0.0
    %522 = vmatpush1.msra.mxu0 %v262
    %523 = vmatprep.subr.mxu0 0.0
    %524 = vmatpush1.msra.mxu0 %v263
    %525 = vmatprep.subr.mxu0 0.0
    %526 = vmatpush1.msra.mxu0 %v264
    %527 = vmatprep.subr.mxu0 0.0
    %528 = vmatpush1.msra.mxu0 0.0
    %529 = vmatprep.subr.mxu0 0.0
    %530 = vmatpush1.msra.mxu0 0.0
    %531 = vmatprep.subr.mxu0 0.0
    %532 = vmatpush1.msra.mxu0 0.0
    %533 = vmatprep.subr.mxu0 0.0
    %534 = vmatpush1.msra.mxu0 0.0
    %535 = vmatprep.subr.mxu0 0.0
    %536 = vmatpush1.msra.mxu0 0.0
    %537 = vmatprep.subr.mxu0 0.0
    %538 = vmatpush1.msra.mxu0 0.0
    %539 = vmatprep.subr.mxu0 0.0
    %540 = vmatpush1.msra.mxu0 0.0
    %541 = vmatprep.subr.mxu0 0.0
    %542 = vmatpush1.msra.mxu0 0.0
    %543 = vmatprep.subr.mxu0 0.0
    %544 = vmatpush1.msra.mxu0 0.0
    %545 = vmatprep.subr.mxu0 0.0
    %546 = vmatpush1.msra.mxu0 0.0
    %547 = vmatprep.subr.mxu0 0.0
    %548 = vmatpush1.msra.mxu0 0.0
    %549 = vmatprep.subr.mxu0 0.0
    %550 = vmatpush1.msra.mxu0 0.0
    %551 = vmatprep.subr.mxu0 0.0
    %552 = vmatpush1.msra.mxu0 0.0
    %553 = vmatprep.subr.mxu0 0.0
    %554 = vmatpush1.msra.mxu0 0.0
    %555 = vmatprep.subr.mxu0 0.0
    %556 = vmatpush1.msra.mxu0 0.0
    %557 = vmatprep.subr.mxu0 0.0
    %558 = vmatpush1.msra.mxu0 0.0
    %559 = vmatprep.subr.mxu0 0.0
    %560 = vmatpush1.msra.mxu0 0.0
    %561 = vmatprep.subr.mxu0 0.0
    %562 = vmatpush1.msra.mxu0 0.0
    %563 = vmatprep.subr.mxu0 0.0
    %564 = vmatpush1.msra.mxu0 0.0
    %565 = vmatprep.subr.mxu0 0.0
    %566 = vmatpush1.msra.mxu0 0.0
    %567 = vmatprep.subr.mxu0 0.0
    %568 = vmatpush1.msra.mxu0 0.0
    %569 = vmatprep.subr.mxu0 0.0
    %570 = vmatpush1.msra.mxu0 0.0
    %571 = vmatprep.subr.mxu0 0.0
    %572 = vmatpush1.msra.mxu0 0.0
    %573 = vmatprep.subr.mxu0 0.0
    %574 = vmatpush1.msra.mxu0 0.0
    %575 = vmatprep.mubr.f32.mxu0 0.0
    %576 = vmatmul.mubr.f32.gmra.mrb[0].mxu0 %v509
    %v577 = vpop.f32.mrb[0].mxu0
    %v578 = vadd.f32 %v270, %v577
    %v579 = vpop.f32.mrb[0].mxu0
    %580 = vdwg.mxu0
    %v581 = vtanh.pop %v578
    %v583 = vrot.slane %v500, 2
    %v584 = vsel %vm171, %v583, 0
    %586 = vmatprep.subr.mxu0 0.0
    %587 = vmatpush1.msra.mxu0 %v253
    %588 = vmatprep.subr.mxu0 0.0
    %589 = vmatpush1.msra.mxu0 %v254
    %590 = vmatprep.subr.mxu0 0.0
    %591 = vmatpush1.msra.mxu0 %v255
    %592 = vmatprep.subr.mxu0 0.0
    %593 = vmatpush1.msra.mxu0 %v256
    %594 = vmatprep.subr.mxu0 0.0
    %595 = vmatpush1.msra.mxu0 0.0
    %596 = vmatprep.subr.mxu0 0.0
    %597 = vmatpush1.msra.mxu0 0.0
    %598 = vmatprep.subr.mxu0 0.0
    %599 = vmatpush1.msra.mxu0 0.0
    %600 = vmatprep.subr.mxu0 0.0
    %601 = vmatpush1.msra.mxu0 0.0
    %602 = vmatprep.subr.mxu0 0.0
    %603 = vmatpush1.msra.mxu0 0.0
    %604 = vmatprep.subr.mxu0 0.0
    %605 = vmatpush1.msra.mxu0 0.0
    %606 = vmatprep.subr.mxu0 0.0
    %607 = vmatpush1.msra.mxu0 0.0
    %608 = vmatprep.subr.mxu0 0.0
    %609 = vmatpush1.msra.mxu0 0.0
    %610 = vmatprep.subr.mxu0 0.0
    %611 = vmatpush1.msra.mxu0 0.0
    %612 = vmatprep.subr.mxu0 0.0
    %613 = vmatpush1.msra.mxu0 0.0
    %614 = vmatprep.subr.mxu0 0.0
    %615 = vmatpush1.msra.mxu0 0.0
    %616 = vmatprep.subr.mxu0 0.0
    %617 = vmatpush1.msra.mxu0 0.0
    %618 = vmatprep.subr.mxu0 0.0
    %619 = vmatpush1.msra.mxu0 0.0
    %620 = vmatprep.subr.mxu0 0.0
    %621 = vmatpush1.msra.mxu0 0.0
    %622 = vmatprep.subr.mxu0 0.0
    %623 = vmatpush1.msra.mxu0 0.0
    %624 = vmatprep.subr.mxu0 0.0
    %625 = vmatpush1.msra.mxu0 0.0
    %626 = vmatprep.subr.mxu0 0.0
    %627 = vmatpush1.msra.mxu0 0.0
    %628 = vmatprep.subr.mxu0 0.0
    %629 = vmatpush1.msra.mxu0 0.0
    %630 = vmatprep.subr.mxu0 0.0
    %631 = vmatpush1.msra.mxu0 0.0
    %632 = vmatprep.subr.mxu0 0.0
    %633 = vmatpush1.msra.mxu0 0.0
    %634 = vmatprep.subr.mxu0 0.0
    %635 = vmatpush1.msra.mxu0 0.0
    %636 = vmatprep.subr.mxu0 0.0
    %637 = vmatpush1.msra.mxu0 0.0
    %638 = vmatprep.subr.mxu0 0.0
    %639 = vmatpush1.msra.mxu0 0.0
    %640 = vmatprep.subr.mxu0 0.0
    %641 = vmatpush1.msra.mxu0 0.0
    %642 = vmatprep.subr.mxu0 0.0
    %643 = vmatpush1.msra.mxu0 0.0
    %644 = vmatprep.subr.mxu0 0.0
    %645 = vmatpush1.msra.mxu0 0.0
    %646 = vmatprep.subr.mxu0 0.0
    %647 = vmatpush1.msra.mxu0 0.0
    %648 = vmatprep.subr.mxu0 0.0
    %649 = vmatpush1.msra.mxu0 0.0
    %650 = vmatprep.mubr.f32.mxu0 0.0
    %651 = vmatmul.mubr.f32.gmra.mrb[0].mxu0 %v584
    %v652 = vpop.f32.mrb[0].mxu0
    %v653 = vadd.f32 0.0, %v652
    %v654 = vpop.f32.mrb[0].mxu0
    %655 = vdwg.mxu0
    %v657 = vrot.slane %v653, 4
    %v659 = vadd.f32 %v245, %v657
    %v660 = vtanh.pop %v659
    %v662 = vrot.slane %v581, 4
    %663 = vrot.lane.b32.xlu0 %v662, 32
    %v664 = vpop.permute.xlu0 %663
    %v666 = vsel %vm171, %v660, %v664
    %v668 = vrot.slane %v666, 4
    %v669 = vsel %vm348, %v668, 0
    %671 = vmatprep.subr.mxu0 0.0
    %672 = vmatpush1.msra.mxu0 %v257
    %673 = vmatprep.subr.mxu0 0.0
    %674 = vmatpush1.msra.mxu0 %v258
    %675 = vmatprep.subr.mxu0 0.0
    %676 = vmatpush1.msra.mxu0 %v259
    %677 = vmatprep.subr.mxu0 0.0
    %678 = vmatpush1.msra.mxu0 %v260
    %679 = vmatprep.subr.mxu0 0.0
    %680 = vmatpush1.msra.mxu0 %v261
    %681 = vmatprep.subr.mxu0 0.0
    %682 = vmatpush1.msra.mxu0 %v262
    %683 = vmatprep.subr.mxu0 0.0
    %684 = vmatpush1.msra.mxu0 %v263
    %685 = vmatprep.subr.mxu0 0.0
    %686 = vmatpush1.msra.mxu0 %v264
    %687 = vmatprep.subr.mxu0 0.0
    %688 = vmatpush1.msra.mxu0 0.0
    %689 = vmatprep.subr.mxu0 0.0
    %690 = vmatpush1.msra.mxu0 0.0
    %691 = vmatprep.subr.mxu0 0.0
    %692 = vmatpush1.msra.mxu0 0.0
    %693 = vmatprep.subr.mxu0 0.0
    %694 = vmatpush1.msra.mxu0 0.0
    %695 = vmatprep.subr.mxu0 0.0
    %696 = vmatpush1.msra.mxu0 0.0
    %697 = vmatprep.subr.mxu0 0.0
    %698 = vmatpush1.msra.mxu0 0.0
    %699 = vmatprep.subr.mxu0 0.0
    %700 = vmatpush1.msra.mxu0 0.0
    %701 = vmatprep.subr.mxu0 0.0
    %702 = vmatpush1.msra.mxu0 0.0
    %703 = vmatprep.subr.mxu0 0.0
    %704 = vmatpush1.msra.mxu0 0.0
    %705 = vmatprep.subr.mxu0 0.0
    %706 = vmatpush1.msra.mxu0 0.0
    %707 = vmatprep.subr.mxu0 0.0
    %708 = vmatpush1.msra.mxu0 0.0
    %709 = vmatprep.subr.mxu0 0.0
    %710 = vmatpush1.msra.mxu0 0.0
    %711 = vmatprep.subr.mxu0 0.0
    %712 = vmatpush1.msra.mxu0 0.0
    %713 = vmatprep.subr.mxu0 0.0
    %714 = vmatpush1.msra.mxu0 0.0
    %715 = vmatprep.subr.mxu0 0.0
    %716 = vmatpush1.msra.mxu0 0.0
    %717 = vmatprep.subr.mxu0 0.0
    %718 = vmatpush1.msra.mxu0 0.0
    %719 = vmatprep.subr.mxu0 0.0
    %720 = vmatpush1.msra.mxu0 0.0
    %721 = vmatprep.subr.mxu0 0.0
    %722 = vmatpush1.msra.mxu0 0.0
    %723 = vmatprep.subr.mxu0 0.0
    %724 = vmatpush1.msra.mxu0 0.0
    %725 = vmatprep.subr.mxu0 0.0
    %726 = vmatpush1.msra.mxu0 0.0
    %727 = vmatprep.subr.mxu0 0.0
    %728 = vmatpush1.msra.mxu0 0.0
    %729 = vmatprep.subr.mxu0 0.0
    %730 = vmatpush1.msra.mxu0 0.0
    %731 = vmatprep.subr.mxu0 0.0
    %732 = vmatpush1.msra.mxu0 0.0
    %733 = vmatprep.subr.mxu0 0.0
    %734 = vmatpush1.msra.mxu0 0.0
    %735 = vmatprep.mubr.f32.mxu0 0.0
    %736 = vmatmul.mubr.f32.gmra.mrb[0].mxu0 %v669
    %v737 = vpop.f32.mrb[0].mxu0
    %v738 = vadd.f32 %v270, %v737
    %v739 = vpop.f32.mrb[0].mxu0
    %740 = vdwg.mxu0
    %v741 = vtanh.pop %v738
    %v743 = vrot.slane %v660, 4
    %v744 = vsel %vm171, %v743, 0
    %746 = vmatprep.subr.mxu0 0.0
    %747 = vmatpush1.msra.mxu0 %v253
    %748 = vmatprep.subr.mxu0 0.0
    %749 = vmatpush1.msra.mxu0 %v254
    %750 = vmatprep.subr.mxu0 0.0
    %751 = vmatpush1.msra.mxu0 %v255
    %752 = vmatprep.subr.mxu0 0.0
    %753 = vmatpush1.msra.mxu0 %v256
    %754 = vmatprep.subr.mxu0 0.0
    %755 = vmatpush1.msra.mxu0 0.0
    %756 = vmatprep.subr.mxu0 0.0
    %757 = vmatpush1.msra.mxu0 0.0
    %758 = vmatprep.subr.mxu0 0.0
    %759 = vmatpush1.msra.mxu0 0.0
    %760 = vmatprep.subr.mxu0 0.0
    %761 = vmatpush1.msra.mxu0 0.0
    %762 = vmatprep.subr.mxu0 0.0
    %763 = vmatpush1.msra.mxu0 0.0
    %764 = vmatprep.subr.mxu0 0.0
    %765 = vmatpush1.msra.mxu0 0.0
    %766 = vmatprep.subr.mxu0 0.0
    %767 = vmatpush1.msra.mxu0 0.0
    %768 = vmatprep.subr.mxu0 0.0
    %769 = vmatpush1.msra.mxu0 0.0
    %770 = vmatprep.subr.mxu0 0.0
    %771 = vmatpush1.msra.mxu0 0.0
    %772 = vmatprep.subr.mxu0 0.0
    %773 = vmatpush1.msra.mxu0 0.0
    %774 = vmatprep.subr.mxu0 0.0
    %775 = vmatpush1.msra.mxu0 0.0
    %776 = vmatprep.subr.mxu0 0.0
    %777 = vmatpush1.msra.mxu0 0.0
    %778 = vmatprep.subr.mxu0 0.0
    %779 = vmatpush1.msra.mxu0 0.0
    %780 = vmatprep.subr.mxu0 0.0
    %781 = vmatpush1.msra.mxu0 0.0
    %782 = vmatprep.subr.mxu0 0.0
    %783 = vmatpush1.msra.mxu0 0.0
    %784 = vmatprep.subr.mxu0 0.0
    %785 = vmatpush1.msra.mxu0 0.0
    %786 = vmatprep.subr.mxu0 0.0
    %787 = vmatpush1.msra.mxu0 0.0
    %788 = vmatprep.subr.mxu0 0.0
    %789 = vmatpush1.msra.mxu0 0.0
    %790 = vmatprep.subr.mxu0 0.0
    %791 = vmatpush1.msra.mxu0 0.0
    %792 = vmatprep.subr.mxu0 0.0
    %793 = vmatpush1.msra.mxu0 0.0
    %794 = vmatprep.subr.mxu0 0.0
    %795 = vmatpush1.msra.mxu0 0.0
    %796 = vmatprep.subr.mxu0 0.0
    %797 = vmatpush1.msra.mxu0 0.0
    %798 = vmatprep.subr.mxu0 0.0
    %799 = vmatpush1.msra.mxu0 0.0
    %800 = vmatprep.subr.mxu0 0.0
    %801 = vmatpush1.msra.mxu0 0.0
    %802 = vmatprep.subr.mxu0 0.0
    %803 = vmatpush1.msra.mxu0 0.0
    %804 = vmatprep.subr.mxu0 0.0
    %805 = vmatpush1.msra.mxu0 0.0
    %806 = vmatprep.subr.mxu0 0.0
    %807 = vmatpush1.msra.mxu0 0.0
    %808 = vmatprep.subr.mxu0 0.0
    %809 = vmatpush1.msra.mxu0 0.0
    %810 = vmatprep.mubr.f32.mxu0 0.0
    %811 = vmatmul.mubr.f32.gmra.mrb[0].mxu0 %v744
    %v812 = vpop.f32.mrb[0].mxu0
    %v813 = vadd.f32 0.0, %v812
    %v814 = vpop.f32.mrb[0].mxu0
    %815 = vdwg.mxu0
    %v817 = vrot.slane %v813, 2
    %v819 = vadd.f32 %v245, %v817
    %v820 = vtanh.pop %v819
    %v822 = vrot.slane %v741, 2
    %823 = vrot.lane.b32.xlu0 %v822, 32
    %v824 = vpop.permute.xlu0 %823
    %v826 = vsel %vm171, %v820, %v824
    %v828 = vrot.slane %v826, 6
    %v829 = vsel %vm348, %v828, 0
    %831 = vmatprep.subr.mxu0 0.0
    %832 = vmatpush1.msra.mxu0 %v257
    %833 = vmatprep.subr.mxu0 0.0
    %834 = vmatpush1.msra.mxu0 %v258
    %835 = vmatprep.subr.mxu0 0.0
    %836 = vmatpush1.msra.mxu0 %v259
    %837 = vmatprep.subr.mxu0 0.0
    %838 = vmatpush1.msra.mxu0 %v260
    %839 = vmatprep.subr.mxu0 0.0
    %840 = vmatpush1.msra.mxu0 %v261
    %841 = vmatprep.subr.mxu0 0.0
    %842 = vmatpush1.msra.mxu0 %v262
    %843 = vmatprep.subr.mxu0 0.0
    %844 = vmatpush1.msra.mxu0 %v263
    %845 = vmatprep.subr.mxu0 0.0
    %846 = vmatpush1.msra.mxu0 %v264
    %847 = vmatprep.subr.mxu0 0.0
    %848 = vmatpush1.msra.mxu0 0.0
    %849 = vmatprep.subr.mxu0 0.0
    %850 = vmatpush1.msra.mxu0 0.0
    %851 = vmatprep.subr.mxu0 0.0
    %852 = vmatpush1.msra.mxu0 0.0
    %853 = vmatprep.subr.mxu0 0.0
    %854 = vmatpush1.msra.mxu0 0.0
    %855 = vmatprep.subr.mxu0 0.0
    %856 = vmatpush1.msra.mxu0 0.0
    %857 = vmatprep.subr.mxu0 0.0
    %858 = vmatpush1.msra.mxu0 0.0
    %859 = vmatprep.subr.mxu0 0.0
    %860 = vmatpush1.msra.mxu0 0.0
    %861 = vmatprep.subr.mxu0 0.0
    %862 = vmatpush1.msra.mxu0 0.0
    %863 = vmatprep.subr.mxu0 0.0
    %864 = vmatpush1.msra.mxu0 0.0
    %865 = vmatprep.subr.mxu0 0.0
    %866 = vmatpush1.msra.mxu0 0.0
    %867 = vmatprep.subr.mxu0 0.0
    %868 = vmatpush1.msra.mxu0 0.0
    %869 = vmatprep.subr.mxu0 0.0
    %870 = vmatpush1.msra.mxu0 0.0
    %871 = vmatprep.subr.mxu0 0.0
    %872 = vmatpush1.msra.mxu0 0.0
    %873 = vmatprep.subr.mxu0 0.0
    %874 = vmatpush1.msra.mxu0 0.0
    %875 = vmatprep.subr.mxu0 0.0
    %876 = vmatpush1.msra.mxu0 0.0
    %877 = vmatprep.subr.mxu0 0.0
    %878 = vmatpush1.msra.mxu0 0.0
    %879 = vmatprep.subr.mxu0 0.0
    %880 = vmatpush1.msra.mxu0 0.0
    %881 = vmatprep.subr.mxu0 0.0
    %882 = vmatpush1.msra.mxu0 0.0
    %883 = vmatprep.subr.mxu0 0.0
    %884 = vmatpush1.msra.mxu0 0.0
    %885 = vmatprep.subr.mxu0 0.0
    %886 = vmatpush1.msra.mxu0 0.0
    %887 = vmatprep.subr.mxu0 0.0
    %888 = vmatpush1.msra.mxu0 0.0
    %889 = vmatprep.subr.mxu0 0.0
    %890 = vmatpush1.msra.mxu0 0.0
    %891 = vmatprep.subr.mxu0 0.0
    %892 = vmatpush1.msra.mxu0 0.0
    %893 = vmatprep.subr.mxu0 0.0
    %894 = vmatpush1.msra.mxu0 0.0
    %895 = vmatprep.mubr.f32.mxu0 0.0
    %896 = vmatmul.mubr.f32.gmra.mrb[0].mxu0 %v829
    %v897 = vpop.f32.mrb[0].mxu0
    %v898 = vadd.f32 %v270, %v897
    %v899 = vpop.f32.mrb[0].mxu0
    %900 = vdwg.mxu0
    %v901 = vtanh.pop %v898
    %v903 = vrot.slane %v820, 6
    %v904 = vsel %vm171, %v903, 0
    %906 = vmatprep.subr.mxu0 0.0
    %907 = vmatpush1.msra.mxu0 %v253
    %908 = vmatprep.subr.mxu0 0.0
    %909 = vmatpush1.msra.mxu0 %v254
    %910 = vmatprep.subr.mxu0 0.0
    %911 = vmatpush1.msra.mxu0 %v255
    %912 = vmatprep.subr.mxu0 0.0
    %913 = vmatpush1.msra.mxu0 %v256
    %914 = vmatprep.subr.mxu0 0.0
    %915 = vmatpush1.msra.mxu0 0.0
    %916 = vmatprep.subr.mxu0 0.0
    %917 = vmatpush1.msra.mxu0 0.0
    %918 = vmatprep.subr.mxu0 0.0
    %919 = vmatpush1.msra.mxu0 0.0
    %920 = vmatprep.subr.mxu0 0.0
    %921 = vmatpush1.msra.mxu0 0.0
    %922 = vmatprep.subr.mxu0 0.0
    %923 = vmatpush1.msra.mxu0 0.0
    %924 = vmatprep.subr.mxu0 0.0
    %925 = vmatpush1.msra.mxu0 0.0
    %926 = vmatprep.subr.mxu0 0.0
    %927 = vmatpush1.msra.mxu0 0.0
    %928 = vmatprep.subr.mxu0 0.0
    %929 = vmatpush1.msra.mxu0 0.0
    %930 = vmatprep.subr.mxu0 0.0
    %931 = vmatpush1.msra.mxu0 0.0
    %932 = vmatprep.subr.mxu0 0.0
    %933 = vmatpush1.msra.mxu0 0.0
    %934 = vmatprep.subr.mxu0 0.0
    %935 = vmatpush1.msra.mxu0 0.0
    %936 = vmatprep.subr.mxu0 0.0
    %937 = vmatpush1.msra.mxu0 0.0
    %938 = vmatprep.subr.mxu0 0.0
    %939 = vmatpush1.msra.mxu0 0.0
    %940 = vmatprep.subr.mxu0 0.0
    %941 = vmatpush1.msra.mxu0 0.0
    %942 = vmatprep.subr.mxu0 0.0
    %943 = vmatpush1.msra.mxu0 0.0
    %944 = vmatprep.subr.mxu0 0.0
    %945 = vmatpush1.msra.mxu0 0.0
    %946 = vmatprep.subr.mxu0 0.0
    %947 = vmatpush1.msra.mxu0 0.0
    %948 = vmatprep.subr.mxu0 0.0
    %949 = vmatpush1.msra.mxu0 0.0
    %950 = vmatprep.subr.mxu0 0.0
    %951 = vmatpush1.msra.mxu0 0.0
    %952 = vmatprep.subr.mxu0 0.0
    %953 = vmatpush1.msra.mxu0 0.0
    %954 = vmatprep.subr.mxu0 0.0
    %955 = vmatpush1.msra.mxu0 0.0
    %956 = vmatprep.subr.mxu0 0.0
    %957 = vmatpush1.msra.mxu0 0.0
    %958 = vmatprep.subr.mxu0 0.0
    %959 = vmatpush1.msra.mxu0 0.0
    %960 = vmatprep.subr.mxu0 0.0
    %961 = vmatpush1.msra.mxu0 0.0
    %962 = vmatprep.subr.mxu0 0.0
    %963 = vmatpush1.msra.mxu0 0.0
    %964 = vmatprep.subr.mxu0 0.0
    %965 = vmatpush1.msra.mxu0 0.0
    %966 = vmatprep.subr.mxu0 0.0
    %967 = vmatpush1.msra.mxu0 0.0
    %968 = vmatprep.subr.mxu0 0.0
    %969 = vmatpush1.msra.mxu0 0.0
    %970 = vmatprep.mubr.f32.mxu0 0.0
    %971 = vmatmul.mubr.f32.gmra.mrb[0].mxu0 %v904
    %v972 = vpop.f32.mrb[0].mxu0
    %v973 = vadd.f32 0.0, %v972
    %v974 = vpop.f32.mrb[0].mxu0
    %975 = vdwg.mxu0
    %v976 = vadd.f32 %v250, %v973
    %v977 = vtanh.pop %v976
    %979 = vrot.lane.b32.xlu0 %v901, 32
    %v980 = vpop.permute.xlu0 %979
    %v982 = vsel %vm171, %v977, %v980
    %v984 = vsel %vm348, %v982, 0
    %986 = vmatprep.subr.mxu0 0.0
    %987 = vmatpush1.msra.mxu0 %v257
    %988 = vmatprep.subr.mxu0 0.0
    %989 = vmatpush1.msra.mxu0 %v258
    %990 = vmatprep.subr.mxu0 0.0
    %991 = vmatpush1.msra.mxu0 %v259
    %992 = vmatprep.subr.mxu0 0.0
    %993 = vmatpush1.msra.mxu0 %v260
    %994 = vmatprep.subr.mxu0 0.0
    %995 = vmatpush1.msra.mxu0 %v261
    %996 = vmatprep.subr.mxu0 0.0
    %997 = vmatpush1.msra.mxu0 %v262
    %998 = vmatprep.subr.mxu0 0.0
    %999 = vmatpush1.msra.mxu0 %v263
    %1000 = vmatprep.subr.mxu0 0.0
    %1001 = vmatpush1.msra.mxu0 %v264
    %1002 = vmatprep.subr.mxu0 0.0
    %1003 = vmatpush1.msra.mxu0 0.0
    %1004 = vmatprep.subr.mxu0 0.0
    %1005 = vmatpush1.msra.mxu0 0.0
    %1006 = vmatprep.subr.mxu0 0.0
    %1007 = vmatpush1.msra.mxu0 0.0
    %1008 = vmatprep.subr.mxu0 0.0
    %1009 = vmatpush1.msra.mxu0 0.0
    %1010 = vmatprep.subr.mxu0 0.0
    %1011 = vmatpush1.msra.mxu0 0.0
    %1012 = vmatprep.subr.mxu0 0.0
    %1013 = vmatpush1.msra.mxu0 0.0
    %1014 = vmatprep.subr.mxu0 0.0
    %1015 = vmatpush1.msra.mxu0 0.0
    %1016 = vmatprep.subr.mxu0 0.0
    %1017 = vmatpush1.msra.mxu0 0.0
    %1018 = vmatprep.subr.mxu0 0.0
    %1019 = vmatpush1.msra.mxu0 0.0
    %1020 = vmatprep.subr.mxu0 0.0
    %1021 = vmatpush1.msra.mxu0 0.0
    %1022 = vmatprep.subr.mxu0 0.0
    %1023 = vmatpush1.msra.mxu0 0.0
    %1024 = vmatprep.subr.mxu0 0.0
    %1025 = vmatpush1.msra.mxu0 0.0
    %1026 = vmatprep.subr.mxu0 0.0
    %1027 = vmatpush1.msra.mxu0 0.0
    %1028 = vmatprep.subr.mxu0 0.0
    %1029 = vmatpush1.msra.mxu0 0.0
    %1030 = vmatprep.subr.mxu0 0.0
    %1031 = vmatpush1.msra.mxu0 0.0
    %1032 = vmatprep.subr.mxu0 0.0
    %1033 = vmatpush1.msra.mxu0 0.0
    %1034 = vmatprep.subr.mxu0 0.0
    %1035 = vmatpush1.msra.mxu0 0.0
    %1036 = vmatprep.subr.mxu0 0.0
    %1037 = vmatpush1.msra.mxu0 0.0
    %1038 = vmatprep.subr.mxu0 0.0
    %1039 = vmatpush1.msra.mxu0 0.0
    %1040 = vmatprep.subr.mxu0 0.0
    %1041 = vmatpush1.msra.mxu0 0.0
    %1042 = vmatprep.subr.mxu0 0.0
    %1043 = vmatpush1.msra.mxu0 0.0
    %1044 = vmatprep.subr.mxu0 0.0
    %1045 = vmatpush1.msra.mxu0 0.0
    %1046 = vmatprep.subr.mxu0 0.0
    %1047 = vmatpush1.msra.mxu0 0.0
    %1048 = vmatprep.subr.mxu0 0.0
    %1049 = vmatpush1.msra.mxu0 0.0
    %1050 = vmatprep.mubr.f32.mxu0 0.0
    %1051 = vmatmul.mubr.f32.gmra.mrb[0].mxu0 %v984
    %v1052 = vpop.f32.mrb[0].mxu0
    %v1053 = vadd.f32 %v270, %v1052
    %v1054 = vpop.f32.mrb[0].mxu0
    %1055 = vdwg.mxu0
    %v1056 = vtanh.pop %v1053
    %v1058 = vsel %vm171, %v977, 0
    %1060 = vmatprep.subr.mxu0 0.0
    %1061 = vmatpush1.msra.mxu0 %v253
    %1062 = vmatprep.subr.mxu0 0.0
    %1063 = vmatpush1.msra.mxu0 %v254
    %1064 = vmatprep.subr.mxu0 0.0
    %1065 = vmatpush1.msra.mxu0 %v255
    %1066 = vmatprep.subr.mxu0 0.0
    %1067 = vmatpush1.msra.mxu0 %v256
    %1068 = vmatprep.subr.mxu0 0.0
    %1069 = vmatpush1.msra.mxu0 0.0
    %1070 = vmatprep.subr.mxu0 0.0
    %1071 = vmatpush1.msra.mxu0 0.0
    %1072 = vmatprep.subr.mxu0 0.0
    %1073 = vmatpush1.msra.mxu0 0.0
    %1074 = vmatprep.subr.mxu0 0.0
    %1075 = vmatpush1.msra.mxu0 0.0
    %1076 = vmatprep.subr.mxu0 0.0
    %1077 = vmatpush1.msra.mxu0 0.0
    %1078 = vmatprep.subr.mxu0 0.0
    %1079 = vmatpush1.msra.mxu0 0.0
    %1080 = vmatprep.subr.mxu0 0.0
    %1081 = vmatpush1.msra.mxu0 0.0
    %1082 = vmatprep.subr.mxu0 0.0
    %1083 = vmatpush1.msra.mxu0 0.0
    %1084 = vmatprep.subr.mxu0 0.0
    %1085 = vmatpush1.msra.mxu0 0.0
    %1086 = vmatprep.subr.mxu0 0.0
    %1087 = vmatpush1.msra.mxu0 0.0
    %1088 = vmatprep.subr.mxu0 0.0
    %1089 = vmatpush1.msra.mxu0 0.0
    %1090 = vmatprep.subr.mxu0 0.0
    %1091 = vmatpush1.msra.mxu0 0.0
    %1092 = vmatprep.subr.mxu0 0.0
    %1093 = vmatpush1.msra.mxu0 0.0
    %1094 = vmatprep.subr.mxu0 0.0
    %1095 = vmatpush1.msra.mxu0 0.0
    %1096 = vmatprep.subr.mxu0 0.0
    %1097 = vmatpush1.msra.mxu0 0.0
    %1098 = vmatprep.subr.mxu0 0.0
    %1099 = vmatpush1.msra.mxu0 0.0
    %1100 = vmatprep.subr.mxu0 0.0
    %1101 = vmatpush1.msra.mxu0 0.0
    %1102 = vmatprep.subr.mxu0 0.0
    %1103 = vmatpush1.msra.mxu0 0.0
    %1104 = vmatprep.subr.mxu0 0.0
    %1105 = vmatpush1.msra.mxu0 0.0
    %1106 = vmatprep.subr.mxu0 0.0
    %1107 = vmatpush1.msra.mxu0 0.0
    %1108 = vmatprep.subr.mxu0 0.0
    %1109 = vmatpush1.msra.mxu0 0.0
    %1110 = vmatprep.subr.mxu0 0.0
    %1111 = vmatpush1.msra.mxu0 0.0
    %1112 = vmatprep.subr.mxu0 0.0
    %1113 = vmatpush1.msra.mxu0 0.0
    %1114 = vmatprep.subr.mxu0 0.0
    %1115 = vmatpush1.msra.mxu0 0.0
    %1116 = vmatprep.subr.mxu0 0.0
    %1117 = vmatpush1.msra.mxu0 0.0
    %1118 = vmatprep.subr.mxu0 0.0
    %1119 = vmatpush1.msra.mxu0 0.0
    %1120 = vmatprep.subr.mxu0 0.0
    %1121 = vmatpush1.msra.mxu0 0.0
    %1122 = vmatprep.subr.mxu0 0.0
    %1123 = vmatpush1.msra.mxu0 0.0
    %1124 = vmatprep.mubr.f32.mxu0 0.0
    %1125 = vmatmul.mubr.f32.gmra.mrb[0].mxu0 %v1058
    %v1126 = vpop.f32.mrb[0].mxu0
    %v1127 = vadd.f32 0.0, %v1126
    %v1128 = vpop.f32.mrb[0].mxu0
    %1129 = vdwg.mxu0
    %v1131 = vrot.slane %v1127, 6
    %v1133 = vadd.f32 %v250, %v1131
    %v1134 = vtanh.pop %v1133
    %v1136 = vrot.slane %v1056, 6
    %1137 = vrot.lane.b32.xlu0 %v1136, 32
    %v1138 = vpop.permute.xlu0 %1137
    %v1140 = vsel %vm171, %v1134, %v1138
    %v1142 = vrot.slane %v1140, 2
    %v1143 = vsel %vm348, %v1142, 0
    %1145 = vmatprep.subr.mxu0 0.0
    %1146 = vmatpush1.msra.mxu0 %v257
    %1147 = vmatprep.subr.mxu0 0.0
    %1148 = vmatpush1.msra.mxu0 %v258
    %1149 = vmatprep.subr.mxu0 0.0
    %1150 = vmatpush1.msra.mxu0 %v259
    %1151 = vmatprep.subr.mxu0 0.0
    %1152 = vmatpush1.msra.mxu0 %v260
    %1153 = vmatprep.subr.mxu0 0.0
    %1154 = vmatpush1.msra.mxu0 %v261
    %1155 = vmatprep.subr.mxu0 0.0
    %1156 = vmatpush1.msra.mxu0 %v262
    %1157 = vmatprep.subr.mxu0 0.0
    %1158 = vmatpush1.msra.mxu0 %v263
    %1159 = vmatprep.subr.mxu0 0.0
    %1160 = vmatpush1.msra.mxu0 %v264
    %1161 = vmatprep.subr.mxu0 0.0
    %1162 = vmatpush1.msra.mxu0 0.0
    %1163 = vmatprep.subr.mxu0 0.0
    %1164 = vmatpush1.msra.mxu0 0.0
    %1165 = vmatprep.subr.mxu0 0.0
    %1166 = vmatpush1.msra.mxu0 0.0
    %1167 = vmatprep.subr.mxu0 0.0
    %1168 = vmatpush1.msra.mxu0 0.0
    %1169 = vmatprep.subr.mxu0 0.0
    %1170 = vmatpush1.msra.mxu0 0.0
    %1171 = vmatprep.subr.mxu0 0.0
    %1172 = vmatpush1.msra.mxu0 0.0
    %1173 = vmatprep.subr.mxu0 0.0
    %1174 = vmatpush1.msra.mxu0 0.0
    %1175 = vmatprep.subr.mxu0 0.0
    %1176 = vmatpush1.msra.mxu0 0.0
    %1177 = vmatprep.subr.mxu0 0.0
    %1178 = vmatpush1.msra.mxu0 0.0
    %1179 = vmatprep.subr.mxu0 0.0
    %1180 = vmatpush1.msra.mxu0 0.0
    %1181 = vmatprep.subr.mxu0 0.0
    %1182 = vmatpush1.msra.mxu0 0.0
    %1183 = vmatprep.subr.mxu0 0.0
    %1184 = vmatpush1.msra.mxu0 0.0
    %1185 = vmatprep.subr.mxu0 0.0
    %1186 = vmatpush1.msra.mxu0 0.0
    %1187 = vmatprep.subr.mxu0 0.0
    %1188 = vmatpush1.msra.mxu0 0.0
    %1189 = vmatprep.subr.mxu0 0.0
    %1190 = vmatpush1.msra.mxu0 0.0
    %1191 = vmatprep.subr.mxu0 0.0
    %1192 = vmatpush1.msra.mxu0 0.0
    %1193 = vmatprep.subr.mxu0 0.0
    %1194 = vmatpush1.msra.mxu0 0.0
    %1195 = vmatprep.subr.mxu0 0.0
    %1196 = vmatpush1.msra.mxu0 0.0
    %1197 = vmatprep.subr.mxu0 0.0
    %1198 = vmatpush1.msra.mxu0 0.0
    %1199 = vmatprep.subr.mxu0 0.0
    %1200 = vmatpush1.msra.mxu0 0.0
    %1201 = vmatprep.subr.mxu0 0.0
    %1202 = vmatpush1.msra.mxu0 0.0
    %1203 = vmatprep.subr.mxu0 0.0
    %1204 = vmatpush1.msra.mxu0 0.0
    %1205 = vmatprep.subr.mxu0 0.0
    %1206 = vmatpush1.msra.mxu0 0.0
    %1207 = vmatprep.subr.mxu0 0.0
    %1208 = vmatpush1.msra.mxu0 0.0
    %1209 = vmatprep.mubr.f32.mxu0 0.0
    %1210 = vmatmul.mubr.f32.gmra.mrb[0].mxu0 %v1143
    %v1211 = vpop.f32.mrb[0].mxu0
    %v1212 = vadd.f32 %v270, %v1211
    %v1213 = vpop.f32.mrb[0].mxu0
    %1214 = vdwg.mxu0
    %v1215 = vtanh.pop %v1212
    %v1217 = vrot.slane %v1134, 2
    %v1218 = vsel %vm171, %v1217, 0
    %1220 = vmatprep.subr.mxu0 0.0
    %1221 = vmatpush1.msra.mxu0 %v253
    %1222 = vmatprep.subr.mxu0 0.0
    %1223 = vmatpush1.msra.mxu0 %v254
    %1224 = vmatprep.subr.mxu0 0.0
    %1225 = vmatpush1.msra.mxu0 %v255
    %1226 = vmatprep.subr.mxu0 0.0
    %1227 = vmatpush1.msra.mxu0 %v256
    %1228 = vmatprep.subr.mxu0 0.0
    %1229 = vmatpush1.msra.mxu0 0.0
    %1230 = vmatprep.subr.mxu0 0.0
    %1231 = vmatpush1.msra.mxu0 0.0
    %1232 = vmatprep.subr.mxu0 0.0
    %1233 = vmatpush1.msra.mxu0 0.0
    %1234 = vmatprep.subr.mxu0 0.0
    %1235 = vmatpush1.msra.mxu0 0.0
    %1236 = vmatprep.subr.mxu0 0.0
    %1237 = vmatpush1.msra.mxu0 0.0
    %1238 = vmatprep.subr.mxu0 0.0
    %1239 = vmatpush1.msra.mxu0 0.0
    %1240 = vmatprep.subr.mxu0 0.0
    %1241 = vmatpush1.msra.mxu0 0.0
    %1242 = vmatprep.subr.mxu0 0.0
    %1243 = vmatpush1.msra.mxu0 0.0
    %1244 = vmatprep.subr.mxu0 0.0
    %1245 = vmatpush1.msra.mxu0 0.0
    %1246 = vmatprep.subr.mxu0 0.0
    %1247 = vmatpush1.msra.mxu0 0.0
    %1248 = vmatprep.subr.mxu0 0.0
    %1249 = vmatpush1.msra.mxu0 0.0
    %1250 = vmatprep.subr.mxu0 0.0
    %1251 = vmatpush1.msra.mxu0 0.0
    %1252 = vmatprep.subr.mxu0 0.0
    %1253 = vmatpush1.msra.mxu0 0.0
    %1254 = vmatprep.subr.mxu0 0.0
    %1255 = vmatpush1.msra.mxu0 0.0
    %1256 = vmatprep.subr.mxu0 0.0
    %1257 = vmatpush1.msra.mxu0 0.0
    %1258 = vmatprep.subr.mxu0 0.0
    %1259 = vmatpush1.msra.mxu0 0.0
    %1260 = vmatprep.subr.mxu0 0.0
    %1261 = vmatpush1.msra.mxu0 0.0
    %1262 = vmatprep.subr.mxu0 0.0
    %1263 = vmatpush1.msra.mxu0 0.0
    %1264 = vmatprep.subr.mxu0 0.0
    %1265 = vmatpush1.msra.mxu0 0.0
    %1266 = vmatprep.subr.mxu0 0.0
    %1267 = vmatpush1.msra.mxu0 0.0
    %1268 = vmatprep.subr.mxu0 0.0
    %1269 = vmatpush1.msra.mxu0 0.0
    %1270 = vmatprep.subr.mxu0 0.0
    %1271 = vmatpush1.msra.mxu0 0.0
    %1272 = vmatprep.subr.mxu0 0.0
    %1273 = vmatpush1.msra.mxu0 0.0
    %1274 = vmatprep.subr.mxu0 0.0
    %1275 = vmatpush1.msra.mxu0 0.0
    %1276 = vmatprep.subr.mxu0 0.0
    %1277 = vmatpush1.msra.mxu0 0.0
    %1278 = vmatprep.subr.mxu0 0.0
    %1279 = vmatpush1.msra.mxu0 0.0
    %1280 = vmatprep.subr.mxu0 0.0
    %1281 = vmatpush1.msra.mxu0 0.0
    %1282 = vmatprep.subr.mxu0 0.0
    %1283 = vmatpush1.msra.mxu0 0.0
    %1284 = vmatprep.mubr.f32.mxu0 0.0
    %1285 = vmatmul.mubr.f32.gmra.mrb[0].mxu0 %v1218
    %v1286 = vpop.f32.mrb[0].mxu0
    %v1287 = vadd.f32 0.0, %v1286
    %v1288 = vpop.f32.mrb[0].mxu0
    %1289 = vdwg.mxu0
    %v1291 = vrot.slane %v1287, 4
    %v1293 = vadd.f32 %v250, %v1291
    %v1294 = vtanh.pop %v1293
    %v1296 = vrot.slane %v1215, 4
    %1297 = vrot.lane.b32.xlu0 %v1296, 32
    %v1298 = vpop.permute.xlu0 %1297
    %v1300 = vsel %vm171, %v1294, %v1298
    %v1302 = vrot.slane %v1300, 4
    %v1303 = vsel %vm348, %v1302, 0
    %1305 = vmatprep.subr.mxu0 0.0
    %1306 = vmatpush1.msra.mxu0 %v257
    %1307 = vmatprep.subr.mxu0 0.0
    %1308 = vmatpush1.msra.mxu0 %v258
    %1309 = vmatprep.subr.mxu0 0.0
    %1310 = vmatpush1.msra.mxu0 %v259
    %1311 = vmatprep.subr.mxu0 0.0
    %1312 = vmatpush1.msra.mxu0 %v260
    %1313 = vmatprep.subr.mxu0 0.0
    %1314 = vmatpush1.msra.mxu0 %v261
    %1315 = vmatprep.subr.mxu0 0.0
    %1316 = vmatpush1.msra.mxu0 %v262
    %1317 = vmatprep.subr.mxu0 0.0
    %1318 = vmatpush1.msra.mxu0 %v263
    %1319 = vmatprep.subr.mxu0 0.0
    %1320 = vmatpush1.msra.mxu0 %v264
    %1321 = vmatprep.subr.mxu0 0.0
    %1322 = vmatpush1.msra.mxu0 0.0
    %1323 = vmatprep.subr.mxu0 0.0
    %1324 = vmatpush1.msra.mxu0 0.0
    %1325 = vmatprep.subr.mxu0 0.0
    %1326 = vmatpush1.msra.mxu0 0.0
    %1327 = vmatprep.subr.mxu0 0.0
    %1328 = vmatpush1.msra.mxu0 0.0
    %1329 = vmatprep.subr.mxu0 0.0
    %1330 = vmatpush1.msra.mxu0 0.0
    %1331 = vmatprep.subr.mxu0 0.0
    %1332 = vmatpush1.msra.mxu0 0.0
    %1333 = vmatprep.subr.mxu0 0.0
    %1334 = vmatpush1.msra.mxu0 0.0
    %1335 = vmatprep.subr.mxu0 0.0
    %1336 = vmatpush1.msra.mxu0 0.0
    %1337 = vmatprep.subr.mxu0 0.0
    %1338 = vmatpush1.msra.mxu0 0.0
    %1339 = vmatprep.subr.mxu0 0.0
    %1340 = vmatpush1.msra.mxu0 0.0
    %1341 = vmatprep.subr.mxu0 0.0
    %1342 = vmatpush1.msra.mxu0 0.0
    %1343 = vmatprep.subr.mxu0 0.0
    %1344 = vmatpush1.msra.mxu0 0.0
    %1345 = vmatprep.subr.mxu0 0.0
    %1346 = vmatpush1.msra.mxu0 0.0
    %1347 = vmatprep.subr.mxu0 0.0
    %1348 = vmatpush1.msra.mxu0 0.0
    %1349 = vmatprep.subr.mxu0 0.0
    %1350 = vmatpush1.msra.mxu0 0.0
    %1351 = vmatprep.subr.mxu0 0.0
    %1352 = vmatpush1.msra.mxu0 0.0
    %1353 = vmatprep.subr.mxu0 0.0
    %1354 = vmatpush1.msra.mxu0 0.0
    %1355 = vmatprep.subr.mxu0 0.0
    %1356 = vmatpush1.msra.mxu0 0.0
    %1357 = vmatprep.subr.mxu0 0.0
    %1358 = vmatpush1.msra.mxu0 0.0
    %1359 = vmatprep.subr.mxu0 0.0
    %1360 = vmatpush1.msra.mxu0 0.0
    %1361 = vmatprep.subr.mxu0 0.0
    %1362 = vmatpush1.msra.mxu0 0.0
    %1363 = vmatprep.subr.mxu0 0.0
    %1364 = vmatpush1.msra.mxu0 0.0
    %1365 = vmatprep.subr.mxu0 0.0
    %1366 = vmatpush1.msra.mxu0 0.0
    %1367 = vmatprep.subr.mxu0 0.0
    %1368 = vmatpush1.msra.mxu0 0.0
    %1369 = vmatprep.mubr.f32.mxu0 0.0
    %1370 = vmatmul.mubr.f32.gmra.mrb[0].mxu0 %v1303
    %v1371 = vpop.f32.mrb[0].mxu0
    %v1372 = vadd.f32 %v270, %v1371
    %v1373 = vpop.f32.mrb[0].mxu0
    %1374 = vdwg.mxu0
    %v1375 = vtanh.pop %v1372
    %v1377 = vrot.slane %v1294, 4
    %v1378 = vsel %vm171, %v1377, 0
    %1380 = vmatprep.subr.mxu0 0.0
    %1381 = vmatpush1.msra.mxu0 %v253
    %1382 = vmatprep.subr.mxu0 0.0
    %1383 = vmatpush1.msra.mxu0 %v254
    %1384 = vmatprep.subr.mxu0 0.0
    %1385 = vmatpush1.msra.mxu0 %v255
    %1386 = vmatprep.subr.mxu0 0.0
    %1387 = vmatpush1.msra.mxu0 %v256
    %1388 = vmatprep.subr.mxu0 0.0
    %1389 = vmatpush1.msra.mxu0 0.0
    %1390 = vmatprep.subr.mxu0 0.0
    %1391 = vmatpush1.msra.mxu0 0.0
    %1392 = vmatprep.subr.mxu0 0.0
    %1393 = vmatpush1.msra.mxu0 0.0
    %1394 = vmatprep.subr.mxu0 0.0
    %1395 = vmatpush1.msra.mxu0 0.0
    %1396 = vmatprep.subr.mxu0 0.0
    %1397 = vmatpush1.msra.mxu0 0.0
    %1398 = vmatprep.subr.mxu0 0.0
    %1399 = vmatpush1.msra.mxu0 0.0
    %1400 = vmatprep.subr.mxu0 0.0
    %1401 = vmatpush1.msra.mxu0 0.0
    %1402 = vmatprep.subr.mxu0 0.0
    %1403 = vmatpush1.msra.mxu0 0.0
    %1404 = vmatprep.subr.mxu0 0.0
    %1405 = vmatpush1.msra.mxu0 0.0
    %1406 = vmatprep.subr.mxu0 0.0
    %1407 = vmatpush1.msra.mxu0 0.0
    %1408 = vmatprep.subr.mxu0 0.0
    %1409 = vmatpush1.msra.mxu0 0.0
    %1410 = vmatprep.subr.mxu0 0.0
    %1411 = vmatpush1.msra.mxu0 0.0
    %1412 = vmatprep.subr.mxu0 0.0
    %1413 = vmatpush1.msra.mxu0 0.0
    %1414 = vmatprep.subr.mxu0 0.0
    %1415 = vmatpush1.msra.mxu0 0.0
    %1416 = vmatprep.subr.mxu0 0.0
    %1417 = vmatpush1.msra.mxu0 0.0
    %1418 = vmatprep.subr.mxu0 0.0
    %1419 = vmatpush1.msra.mxu0 0.0
    %1420 = vmatprep.subr.mxu0 0.0
    %1421 = vmatpush1.msra.mxu0 0.0
    %1422 = vmatprep.subr.mxu0 0.0
    %1423 = vmatpush1.msra.mxu0 0.0
    %1424 = vmatprep.subr.mxu0 0.0
    %1425 = vmatpush1.msra.mxu0 0.0
    %1426 = vmatprep.subr.mxu0 0.0
    %1427 = vmatpush1.msra.mxu0 0.0
    %1428 = vmatprep.subr.mxu0 0.0
    %1429 = vmatpush1.msra.mxu0 0.0
    %1430 = vmatprep.subr.mxu0 0.0
    %1431 = vmatpush1.msra.mxu0 0.0
    %1432 = vmatprep.subr.mxu0 0.0
    %1433 = vmatpush1.msra.mxu0 0.0
    %1434 = vmatprep.subr.mxu0 0.0
    %1435 = vmatpush1.msra.mxu0 0.0
    %1436 = vmatprep.subr.mxu0 0.0
    %1437 = vmatpush1.msra.mxu0 0.0
    %1438 = vmatprep.subr.mxu0 0.0
    %1439 = vmatpush1.msra.mxu0 0.0
    %1440 = vmatprep.subr.mxu0 0.0
    %1441 = vmatpush1.msra.mxu0 0.0
    %1442 = vmatprep.subr.mxu0 0.0
    %1443 = vmatpush1.msra.mxu0 0.0
    %1444 = vmatprep.mubr.f32.mxu0 0.0
    %1445 = vmatmul.mubr.f32.gmra.mrb[0].mxu0 %v1378
    %v1446 = vpop.f32.mrb[0].mxu0
    %v1447 = vadd.f32 0.0, %v1446
    %v1448 = vpop.f32.mrb[0].mxu0
    %1449 = vdwg.mxu0
    %v1451 = vrot.slane %v1447, 2
    %v1453 = vadd.f32 %v250, %v1451
    %v1454 = vtanh.pop %v1453
    %v1456 = vrot.slane %v1375, 2
    %1457 = vrot.lane.b32.xlu0 %v1456, 32
    %v1458 = vpop.permute.xlu0 %1457
    %v1460 = vsel %vm171, %v1454, %v1458
    %v1462 = vrot.slane %v1460, 6
    %v1463 = vsel %vm348, %v1462, 0
    %1465 = vmatprep.subr.mxu0 0.0
    %1466 = vmatpush1.msra.mxu0 %v257
    %1467 = vmatprep.subr.mxu0 0.0
    %1468 = vmatpush1.msra.mxu0 %v258
    %1469 = vmatprep.subr.mxu0 0.0
    %1470 = vmatpush1.msra.mxu0 %v259
    %1471 = vmatprep.subr.mxu0 0.0
    %1472 = vmatpush1.msra.mxu0 %v260
    %1473 = vmatprep.subr.mxu0 0.0
    %1474 = vmatpush1.msra.mxu0 %v261
    %1475 = vmatprep.subr.mxu0 0.0
    %1476 = vmatpush1.msra.mxu0 %v262
    %1477 = vmatprep.subr.mxu0 0.0
    %1478 = vmatpush1.msra.mxu0 %v263
    %1479 = vmatprep.subr.mxu0 0.0
    %1480 = vmatpush1.msra.mxu0 %v264
    %1481 = vmatprep.subr.mxu0 0.0
    %1482 = vmatpush1.msra.mxu0 0.0
    %1483 = vmatprep.subr.mxu0 0.0
    %1484 = vmatpush1.msra.mxu0 0.0
    %1485 = vmatprep.subr.mxu0 0.0
    %1486 = vmatpush1.msra.mxu0 0.0
    %1487 = vmatprep.subr.mxu0 0.0
    %1488 = vmatpush1.msra.mxu0 0.0
    %1489 = vmatprep.subr.mxu0 0.0
    %1490 = vmatpush1.msra.mxu0 0.0
    %1491 = vmatprep.subr.mxu0 0.0
    %1492 = vmatpush1.msra.mxu0 0.0
    %1493 = vmatprep.subr.mxu0 0.0
    %1494 = vmatpush1.msra.mxu0 0.0
    %1495 = vmatprep.subr.mxu0 0.0
    %1496 = vmatpush1.msra.mxu0 0.0
    %1497 = vmatprep.subr.mxu0 0.0
    %1498 = vmatpush1.msra.mxu0 0.0
    %1499 = vmatprep.subr.mxu0 0.0
    %1500 = vmatpush1.msra.mxu0 0.0
    %1501 = vmatprep.subr.mxu0 0.0
    %1502 = vmatpush1.msra.mxu0 0.0
    %1503 = vmatprep.subr.mxu0 0.0
    %1504 = vmatpush1.msra.mxu0 0.0
    %1505 = vmatprep.subr.mxu0 0.0
    %1506 = vmatpush1.msra.mxu0 0.0
    %1507 = vmatprep.subr.mxu0 0.0
    %1508 = vmatpush1.msra.mxu0 0.0
    %1509 = vmatprep.subr.mxu0 0.0
    %1510 = vmatpush1.msra.mxu0 0.0
    %1511 = vmatprep.subr.mxu0 0.0
    %1512 = vmatpush1.msra.mxu0 0.0
    %1513 = vmatprep.subr.mxu0 0.0
    %1514 = vmatpush1.msra.mxu0 0.0
    %1515 = vmatprep.subr.mxu0 0.0
    %1516 = vmatpush1.msra.mxu0 0.0
    %1517 = vmatprep.subr.mxu0 0.0
    %1518 = vmatpush1.msra.mxu0 0.0
    %1519 = vmatprep.subr.mxu0 0.0
    %1520 = vmatpush1.msra.mxu0 0.0
    %1521 = vmatprep.subr.mxu0 0.0
    %1522 = vmatpush1.msra.mxu0 0.0
    %1523 = vmatprep.subr.mxu0 0.0
    %1524 = vmatpush1.msra.mxu0 0.0
    %1525 = vmatprep.subr.mxu0 0.0
    %1526 = vmatpush1.msra.mxu0 0.0
    %1527 = vmatprep.subr.mxu0 0.0
    %1528 = vmatpush1.msra.mxu0 0.0
    %1529 = vmatprep.mubr.f32.mxu0 0.0
    %1530 = vmatmul.mubr.f32.gmra.mrb[0].mxu0 %v1463
    %v1531 = vpop.f32.mrb[0].mxu0
    %v1532 = vadd.f32 %v270, %v1531
    %v1533 = vpop.f32.mrb[0].mxu0
    %1534 = vdwg.mxu0
    %v1535 = vtanh.pop %v1532
    %vm1536 = vcmask 254976
    %v1537 = vsel %vm1536, %v1535, 0.0
    %1538 = vadd.xlane.f32.xlu0 %v1537
    %v1539 = vpop.xlane.xlu0 %1538
    %v1540 = vrcp.pop 32.0
    %v1541 = vmul.f32 %v1539, %v1540
    %v1542 = vsub.f32 %v1535, %v1541
    %v1543 = vmul.f32 %v1542, %v1542
    %v1544 = vsel %vm1536, %v1543, 0.0
    %1545 = vadd.xlane.f32.xlu0 %v1544
    %v1546 = vpop.xlane.xlu0 %1545
    %v1547 = vmul.f32 %v1546, %v1540
    %v1548 = vadd.f32 %v1547, 1e-05
    %v1549 = vrsqrt.pop %v1548
    %v1550 = vmul.f32 %v1542, %v1549
    %v1551 = vld [vmem:[%s7] sm:$0x1]
    %v1553 = vlaneseq
    %v1554 = vshrl.u32 %v1553, 7
    %v1555 = vsub.s32 0, %v1554
    %v1556 = vrot.slane %v1551, %v1555
    %v1558 = vmul.f32 %v1550, %v1556
    %v1559 = vld [vmem:[%s8] sm:$0x1]
    %v1561 = vlaneseq
    %v1562 = vshrl.u32 %v1561, 7
    %v1563 = vsub.s32 0, %v1562
    %v1564 = vrot.slane %v1559, %v1563
    %v1566 = vadd.f32 %v1558, %v1564
    %v1567 = vld [vmem:[%s9] sm:$0xff]
    %v1568 = vld [vmem:[%s9 + $0x8] sm:$0xff]
    %v1569 = vld [vmem:[%s9 + $0x10] sm:$0xff]
    %v1570 = vld [vmem:[%s9 + $0x18] sm:$0xff]
    %v1571 = vld [vmem:[%s10] sm:$0x1]
    %v1573 = vlaneseq
    %v1574 = vshrl.u32 %v1573, 7
    %v1575 = vsub.s32 0, %v1574
    %v1576 = vrot.slane %v1571, %v1575
    %v1579 = vsel %vm171, %v1566, 0
    %1581 = vmatprep.subr.mxu0 0.0
    %1582 = vmatpush1.msra.mxu0 %v1567
    %1583 = vmatprep.subr.mxu0 0.0
    %1584 = vmatpush1.msra.mxu0 %v1568
    %1585 = vmatprep.subr.mxu0 0.0
    %1586 = vmatpush1.msra.mxu0 %v1569
    %1587 = vmatprep.subr.mxu0 0.0
    %1588 = vmatpush1.msra.mxu0 %v1570
    %1589 = vmatprep.subr.mxu0 0.0
    %1590 = vmatpush1.msra.mxu0 0.0
    %1591 = vmatprep.subr.mxu0 0.0
    %1592 = vmatpush1.msra.mxu0 0.0
    %1593 = vmatprep.subr.mxu0 0.0
    %1594 = vmatpush1.msra.mxu0 0.0
    %1595 = vmatprep.subr.mxu0 0.0
    %1596 = vmatpush1.msra.mxu0 0.0
    %1597 = vmatprep.subr.mxu0 0.0
    %1598 = vmatpush1.msra.mxu0 0.0
    %1599 = vmatprep.subr.mxu0 0.0
    %1600 = vmatpush1.msra.mxu0 0.0
    %1601 = vmatprep.subr.mxu0 0.0
    %1602 = vmatpush1.msra.mxu0 0.0
    %1603 = vmatprep.subr.mxu0 0.0
    %1604 = vmatpush1.msra.mxu0 0.0
    %1605 = vmatprep.subr.mxu0 0.0
    %1606 = vmatpush1.msra.mxu0 0.0
    %1607 = vmatprep.subr.mxu0 0.0
    %1608 = vmatpush1.msra.mxu0 0.0
    %1609 = vmatprep.subr.mxu0 0.0
    %1610 = vmatpush1.msra.mxu0 0.0
    %1611 = vmatprep.subr.mxu0 0.0
    %1612 = vmatpush1.msra.mxu0 0.0
    %1613 = vmatprep.subr.mxu0 0.0
    %1614 = vmatpush1.msra.mxu0 0.0
    %1615 = vmatprep.subr.mxu0 0.0
    %1616 = vmatpush1.msra.mxu0 0.0
    %1617 = vmatprep.subr.mxu0 0.0
    %1618 = vmatpush1.msra.mxu0 0.0
    %1619 = vmatprep.subr.mxu0 0.0
    %1620 = vmatpush1.msra.mxu0 0.0
    %1621 = vmatprep.subr.mxu0 0.0
    %1622 = vmatpush1.msra.mxu0 0.0
    %1623 = vmatprep.subr.mxu0 0.0
    %1624 = vmatpush1.msra.mxu0 0.0
    %1625 = vmatprep.subr.mxu0 0.0
    %1626 = vmatpush1.msra.mxu0 0.0
    %1627 = vmatprep.subr.mxu0 0.0
    %1628 = vmatpush1.msra.mxu0 0.0
    %1629 = vmatprep.subr.mxu0 0.0
    %1630 = vmatpush1.msra.mxu0 0.0
    %1631 = vmatprep.subr.mxu0 0.0
    %1632 = vmatpush1.msra.mxu0 0.0
    %1633 = vmatprep.subr.mxu0 0.0
    %1634 = vmatpush1.msra.mxu0 0.0
    %1635 = vmatprep.subr.mxu0 0.0
    %1636 = vmatpush1.msra.mxu0 0.0
    %1637 = vmatprep.subr.mxu0 0.0
    %1638 = vmatpush1.msra.mxu0 0.0
    %1639 = vmatprep.subr.mxu0 0.0
    %1640 = vmatpush1.msra.mxu0 0.0
    %1641 = vmatprep.subr.mxu0 0.0
    %1642 = vmatpush1.msra.mxu0 0.0
    %1643 = vmatprep.subr.mxu0 0.0
    %1644 = vmatpush1.msra.mxu0 0.0
    %1645 = vmatprep.mubr.f32.mxu0 0.0
    %1646 = vmatmul.mubr.f32.gmra.mrb[0].mxu0 %v1579
    %v1647 = vpop.f32.mrb[0].mxu0
    %v1648 = vadd.f32 %v1576, %v1647
    %v1649 = vpop.f32.mrb[0].mxu0
    %1650 = vdwg.mxu0
    %v1651 = vmax.f32 %v1648, 0.0
    %v1652 = vld [vmem:[%s11] sm:$0xff]
    %v1653 = vld [vmem:[%s11 + $0x8] sm:$0xff]
    %v1654 = vld [vmem:[%s12] sm:$0x1]
    %v1656 = vlaneseq
    %v1657 = vshrl.u32 %v1656, 7
    %v1658 = vsub.s32 0, %v1657
    %v1659 = vrot.slane %v1654, %v1658
    %vm1661 = vcmask 130048
    %v1663 = vsel %vm1661, %v1651, 0
    %1665 = vmatprep.subr.mxu0 0.0
    %1666 = vmatpush1.msra.mxu0 %v1652
    %1667 = vmatprep.subr.mxu0 0.0
    %1668 = vmatpush1.msra.mxu0 %v1653
    %1669 = vmatprep.subr.mxu0 0.0
    %1670 = vmatpush1.msra.mxu0 0.0
    %1671 = vmatprep.subr.mxu0 0.0
    %1672 = vmatpush1.msra.mxu0 0.0
    %1673 = vmatprep.subr.mxu0 0.0
    %1674 = vmatpush1.msra.mxu0 0.0
    %1675 = vmatprep.subr.mxu0 0.0
    %1676 = vmatpush1.msra.mxu0 0.0
    %1677 = vmatprep.subr.mxu0 0.0
    %1678 = vmatpush1.msra.mxu0 0.0
    %1679 = vmatprep.subr.mxu0 0.0
    %1680 = vmatpush1.msra.mxu0 0.0
    %1681 = vmatprep.subr.mxu0 0.0
    %1682 = vmatpush1.msra.mxu0 0.0
    %1683 = vmatprep.subr.mxu0 0.0
    %1684 = vmatpush1.msra.mxu0 0.0
    %1685 = vmatprep.subr.mxu0 0.0
    %1686 = vmatpush1.msra.mxu0 0.0
    %1687 = vmatprep.subr.mxu0 0.0
    %1688 = vmatpush1.msra.mxu0 0.0
    %1689 = vmatprep.subr.mxu0 0.0
    %1690 = vmatpush1.msra.mxu0 0.0
    %1691 = vmatprep.subr.mxu0 0.0
    %1692 = vmatpush1.msra.mxu0 0.0
    %1693 = vmatprep.subr.mxu0 0.0
    %1694 = vmatpush1.msra.mxu0 0.0
    %1695 = vmatprep.subr.mxu0 0.0
    %1696 = vmatpush1.msra.mxu0 0.0
    %1697 = vmatprep.subr.mxu0 0.0
    %1698 = vmatpush1.msra.mxu0 0.0
    %1699 = vmatprep.subr.mxu0 0.0
    %1700 = vmatpush1.msra.mxu0 0.0
    %1701 = vmatprep.subr.mxu0 0.0
    %1702 = vmatpush1.msra.mxu0 0.0
    %1703 = vmatprep.subr.mxu0 0.0
    %1704 = vmatpush1.msra.mxu0 0.0
    %1705 = vmatprep.subr.mxu0 0.0
    %1706 = vmatpush1.msra.mxu0 0.0
    %1707 = vmatprep.subr.mxu0 0.0
    %1708 = vmatpush1.msra.mxu0 0.0
    %1709 = vmatprep.subr.mxu0 0.0
    %1710 = vmatpush1.msra.mxu0 0.0
    %1711 = vmatprep.subr.mxu0 0.0
    %1712 = vmatpush1.msra.mxu0 0.0
    %1713 = vmatprep.subr.mxu0 0.0
    %1714 = vmatpush1.msra.mxu0 0.0
    %1715 = vmatprep.subr.mxu0 0.0
    %1716 = vmatpush1.msra.mxu0 0.0
    %1717 = vmatprep.subr.mxu0 0.0
    %1718 = vmatpush1.msra.mxu0 0.0
    %1719 = vmatprep.subr.mxu0 0.0
    %1720 = vmatpush1.msra.mxu0 0.0
    %1721 = vmatprep.subr.mxu0 0.0
    %1722 = vmatpush1.msra.mxu0 0.0
    %1723 = vmatprep.subr.mxu0 0.0
    %1724 = vmatpush1.msra.mxu0 0.0
    %1725 = vmatprep.subr.mxu0 0.0
    %1726 = vmatpush1.msra.mxu0 0.0
    %1727 = vmatprep.subr.mxu0 0.0
    %1728 = vmatpush1.msra.mxu0 0.0
    %1729 = vmatprep.mubr.f32.mxu0 0.0
    %1730 = vmatmul.mubr.f32.gmra.mrb[0].mxu0 %v1663
    %v1731 = vpop.f32.mrb[0].mxu0
    %v1732 = vadd.f32 %v1659, %v1731
    %v1733 = vpop.f32.mrb[0].mxu0
    %1734 = vdwg.mxu0
    %vm1735 = vcmask 17408
    %1736 = vst.msk [vmem:[#allocation2] sm:$0x3] %vm1735, %v1732
    // Predicated region
    $region54: #{sentiment_forward.1} parent=1 // pred_check
      _
    $region55: #{sentiment_forward.1} parent=1 // pred_check_branch
      %1738 = sbr.rel (0) target = $region57
    $region56: #{sentiment_forward.1} parent=1 // pred_region
      %s1740 = ssub.s32 32, 32
      %1741 = vsyncadd [#allocation3], %s1740
      %s1743 = sshll.u32 [#allocation2], 4
      %s1744 = int_to_ptr.vmem [resolvable:$true] %s1743
      %1746 = dma.vmem_to_hbm [thread:$0]  %s1744, 32, %s13, [#allocation3]
    $region57: #{sentiment_forward.1} parent=1 // pred_fallthru
      _
    // Predicated region
    $region58: #{sentiment_forward.1} parent=1 // pred_check
      _
    $region59: #{sentiment_forward.1} parent=1 // pred_check_branch
      %1748 = sbr.rel (0) target = $region61
    $region60: #{sentiment_forward.1} parent=1 // pred_region
      %1749 = dma.done [#allocation3], 32
    $region61: #{sentiment_forward.1} parent=1 // pred_fallthru
      _
    %1750 = vsyncpa [#allocation3], 1

</llo_original>
